<compile_context>
chip_gen: v7x
topology: tpu7x:2x2x1
jax: 0.10.0
libtpu: 0.0.40
codegen_flags: <defaults>
</compile_context>

<pallas_src>
import functools
import math

import jax
import jax.numpy as jnp
from jax import lax
from jax.experimental import pallas as pl
from jax.experimental.pallas import tpu as pltpu


def _round_up(n, m):
    return ((n + m - 1) // m) * m


def _rnn_kernel(inp_ref, h0_ref, r0_ref, u0_ref, p_rel_ref, w_eff_t_ref,
                h_all_ref, r_all_ref, u_all_ref,
                h_c, htr_c, r_c, u_c,
                *, dt_over_tau, dt_over_tau_depr, dt_over_tau_facil, beta_dt,
                include_stp, t_chunk, unroll):
    # Load the carried state from the initial conditions on the first chunk;
    # on later chunks the VMEM scratch already holds the carried state.
    @pl.when(pl.program_id(0) == 0)
    def _init():
        h0 = h0_ref[...]
        h_c[...] = h0
        htr_c[...] = jnp.tanh(h0)
        r_c[...] = r0_ref[...]
        u_c[...] = u0_ref[...]

    p_rel = p_rel_ref[...]          # (1, Hp), broadcasts over batch sublanes
    w_eff_t = w_eff_t_ref[...]      # (Hp, Hp) == (gain * presyn * W_hh * mask).T

    def step(t, carry):
        h_prev = h_c[...]
        h_tr = htr_c[...]

        if include_stp:
            r_prev = r_c[...]
            u_prev = u_c[...]
            # Hardtanh(0, 1) == clip; dt folded into the rate constants.
            r_t = jnp.clip(r_prev + (1.0 - r_prev) * dt_over_tau_depr
                           - beta_dt * (u_prev * r_prev * h_tr), 0.0, 1.0)
            u_t = jnp.clip(u_prev + (p_rel - u_prev) * dt_over_tau_facil
                           + beta_dt * (p_rel * (1.0 - u_prev) * h_tr), 0.0, 1.0)
            r_all_ref[t] = r_t
            u_all_ref[t] = u_t
            r_c[...] = r_t
            u_c[...] = u_t
            # effective_weight[i, j] = r[j] u[j] presyn[j] gain W_hh[i,j] mask[i,j];
            # the per-presynaptic factors fold into the activation vector.
            pre = h_tr * (r_prev * u_prev)
        else:
            pre = h_tr

        rec = jnp.dot(pre, w_eff_t, preferred_element_type=jnp.float32)  # MXU (Bp,Hp)
        # TODO(synk): self.noise.normal_(0, noise_std) with noise_std == 0.0 is
        # identically zero -> omitted.
        h_t = h_prev + (inp_ref[t] + rec - h_prev) * dt_over_tau
        h_all_ref[t] = h_t
        h_c[...] = h_t
        htr_c[...] = jnp.tanh(h_t)
        return carry

    lax.fori_loop(0, t_chunk, step, 0, unroll=unroll)

    if not include_stp:
        # Reference fills r/u with ones when STP is disabled: one dense store
        # per chunk instead of two masked stores per timestep.
        r_all_ref[...] = jnp.ones(r_all_ref.shape, r_all_ref.dtype)
        u_all_ref[...] = jnp.ones(u_all_ref.shape, u_all_ref.dtype)
    # TODO(synk): dhdt / dhdt_{t-1} diagnostic (return_dhdh=True path) not produced.


def _choose_t_chunk(seq_len, b_p, h_p, budget_bytes=20 * 1024 * 1024):
    # 4 chunked (T, Bp, Hp) f32 arrays (1 input + 3 outputs), each double-buffered
    # by the Pallas pipeline, must fit the v7x-safe VMEM budget together with the
    # resident weights / state scratch.
    per_t = 2 * 4 * b_p * h_p * 4
    fixed = (h_p * h_p + 8 * b_p * h_p) * 4
    t = max(1, (budget_bytes - fixed) // per_t)
    t = int(min(seq_len, t, 256))
    if t > 8:
        t = (t // 8) * 8
    return max(t, 1)


def rnn_forward(x, h_0, r_0, u_0, params, *, dt=0.001, include_stp=True):
    """x: (batch, seq, n_inputs); h_0/r_0/u_0: (batch, n_hidden)."""
    batch, seq_len, _ = x.shape
    n_hidden = h_0.shape[-1]
    f32 = jnp.float32

    b_p = _round_up(batch, 8)       # sublane tile
    h_p = _round_up(n_hidden, 128)  # lane tile

    gain = params["gain"]
    w_eff = (gain * params["presyn_scaling"][None, :]
             * params["W_hh"] * params["W_hh_mask"]).astype(f32)             # (H, H)
    w_eff_t = jnp.zeros((h_p, h_p), f32).at[:n_hidden, :n_hidden].set(w_eff.T)
    p_rel = jnp.zeros((1, h_p), f32).at[0, :n_hidden].set(params["p_rel"].astype(f32))

    # Hoisted input projection: independent of the recurrent carry, so a single
    # XLA matmul instead of per-step VPU/XLU work on the serial critical path.
    x_tm = jnp.transpose(x, (1, 0, 2)).astype(f32)                            # (S, B, I)
    inp_all = jnp.einsum("sbi,ih->sbh", x_tm, params["W_ih"].astype(f32).T)   # (S, B, H)

    t_chunk = _choose_t_chunk(seq_len, b_p, h_p)
    n_chunks = pl.cdiv(seq_len, t_chunk)
    seq_p = n_chunks * t_chunk
    unroll = t_chunk if t_chunk <= 8 else 8

    inp_p = jnp.zeros((seq_p, b_p, h_p), f32).at[:seq_len, :batch, :n_hidden].set(inp_all)

    def pad_state(s, fill):
        buf = jnp.full((b_p, h_p), fill, f32)
        if s is None:
            return buf
        return buf.at[:batch, :n_hidden].set(s.astype(f32))

    h0p = pad_state(h_0, 0.0)
    if include_stp:
        # TODO(synk): r_0/u_0 == None with include_stp=True (reference freezes
        # that state at 1) is approximated by starting it at 1 here.
        r0p = pad_state(r_0, 1.0)
        u0p = pad_state(u_0, 1.0)
    else:
        r0p = jnp.ones((b_p, h_p), f32)
        u0p = jnp.ones((b_p, h_p), f32)

    chunk_h = pl.BlockSpec((t_chunk, b_p, h_p), lambda c: (c, 0, 0))

    def full_spec(shape):
        nd = len(shape)
        return pl.BlockSpec(shape, lambda c, _nd=nd: (0,) * _nd)

    kernel = functools.partial(
        _rnn_kernel,
        dt_over_tau=float(dt) / 0.01,
        dt_over_tau_depr=float(dt) / 0.2,
        dt_over_tau_facil=float(dt) / 1.5,
        beta_dt=20.0 * float(dt),
        include_stp=include_stp,
        t_chunk=t_chunk,
        unroll=unroll)

    out_shapes = tuple(jax.ShapeDtypeStruct((seq_p, b_p, h_p), f32) for _ in range(3))

    h_tm, r_tm, u_tm = pl.pallas_call(
        kernel,
        out_shape=out_shapes,
        grid_spec=pltpu.PrefetchScalarGridSpec(
            num_scalar_prefetch=0,
            grid=(n_chunks,),
            in_specs=[chunk_h,                      # hoisted input projection
                      full_spec((b_p, h_p)),        # h0
                      full_spec((b_p, h_p)),        # r0
                      full_spec((b_p, h_p)),        # u0
                      full_spec((1, h_p)),          # p_rel
                      full_spec((h_p, h_p))],       # w_eff_t
            out_specs=(chunk_h, chunk_h, chunk_h),
            scratch_shapes=[pltpu.VMEM((b_p, h_p), f32)] * 4),  # h, tanh(h), r, u carry
        compiler_params=pltpu.CompilerParams(
            dimension_semantics=("arbitrary",),
            vmem_limit_bytes=32 * 1024 * 1024),
    )(inp_p, h0p, r0p, u0p, p_rel, w_eff_t)

    def unpad(a):
        return jnp.transpose(a[:seq_len, :batch, :n_hidden], (1, 0, 2))

    h_all = unpad(h_tm)
    r_all = unpad(r_tm)
    u_all = unpad(u_tm)
    # Hoisted readout: tanh(h) @ W_hz.T for all (batch, seq) at once (one XLA matmul).
    z_all = jnp.einsum("bsh,oh->bso", jnp.tanh(h_all), params["W_hz"].astype(f32))
    return h_all, r_all, u_all, z_all


def rnn_reference(x, h_0, r_0, u_0, params, dt=0.001):
    """Pure-JAX reference mirroring the PyTorch loop (batched over batch dim)."""
    batch, seq_len, _ = x.shape
    gain = params["gain"]
    W_eff_base = (gain * params["presyn_scaling"][None, :]
                  * params["W_hh"] * params["W_hh_mask"])        # (H, H)
    p_rel = params["p_rel"][None, :]
    h, r, u = h_0, r_0, u_0
    h_tr = jnp.tanh(h_0)
    hs, rs, us, zs = [], [], [], []
    for t in range(seq_len):
        drdt = (1.0 - r) / 0.2 - 20.0 * u * r * h_tr
        dudt = (p_rel - u) / 1.5 + 20.0 * p_rel * (1.0 - u) * h_tr
        r_t = jnp.clip(r + drdt * dt, 0.0, 1.0)
        u_t = jnp.clip(u + dudt * dt, 0.0, 1.0)
        rec = (h_tr * r * u) @ W_eff_base.T
        dhdt = (-h + x[:, t] @ params["W_ih"].T + rec) / 0.01
        h_t = h + dhdt * dt
        h_tr = jnp.tanh(h_t)
        z_t = h_tr @ params["W_hz"].T
        hs.append(h_t); rs.append(r_t); us.append(u_t); zs.append(z_t)
        h, r, u = h_t, r_t, u_t
    stk = lambda lst: jnp.stack(lst, axis=1)
    return stk(hs), stk(rs), stk(us), stk(zs)


def init_params(key, n_inputs, n_hidden, n_outputs,
                p_rel_range=(0.1, 0.9), prob_c=0.1, include_stp=True):
    k0, k1, k2, k3, k4 = jax.random.split(key, 5)
    p_rel = jax.random.uniform(k0, (n_hidden,), minval=p_rel_range[0],
                               maxval=p_rel_range[1], dtype=jnp.float32)
    W_ih = jax.random.normal(k1, (n_hidden, n_inputs), dtype=jnp.float32) / math.sqrt(n_hidden)
    W_hh = jax.random.normal(k2, (n_hidden, n_hidden), dtype=jnp.float32) / math.sqrt(prob_c * n_hidden)
    n_conns = int(round(prob_c * n_hidden ** 2))
    perm = jax.random.permutation(k3, n_hidden ** 2)
    W_hh_mask = jnp.zeros((n_hidden ** 2,), jnp.float32).at[perm[:n_conns]].set(1.0)
    W_hh_mask = W_hh_mask.reshape(n_hidden, n_hidden)
    W_hz = jax.random.normal(k4, (n_outputs, n_hidden), dtype=jnp.float32) / math.sqrt(n_hidden)
    presyn_scaling = jnp.ones((n_hidden,), jnp.float32)
    gain = 1.6
    if include_stp:
        gain *= 1.0 / ((p_rel_range[0] + p_rel_range[1]) / 2.0)   # 1 / mean(p_rel_range)
    return dict(p_rel=p_rel, W_ih=W_ih, W_hh=W_hh, W_hh_mask=W_hh_mask,
                presyn_scaling=presyn_scaling, W_hz=W_hz, gain=float(gain))


if __name__ == "__main__":
    n_inputs, n_hidden, n_outputs = 1, 32, 1
    batch, seq_len = 2, 8

    params = init_params(jax.random.PRNGKey(0), n_inputs, n_hidden, n_outputs)

    kx, kh, kr, ku = jax.random.split(jax.random.PRNGKey(42), 4)
    x = jax.random.normal(kx, (batch, seq_len, n_inputs), dtype=jnp.float32)
    h_0 = 0.1 * jax.random.normal(kh, (batch, n_hidden), dtype=jnp.float32)
    r_0 = jax.random.uniform(kr, (batch, n_hidden), dtype=jnp.float32)
    u_0 = jax.random.uniform(ku, (batch, n_hidden), dtype=jnp.float32)

    outs = rnn_forward(x, h_0, r_0, u_0, params, dt=0.001, include_stp=True)
    outs = jax.block_until_ready(outs)

    refs = rnn_reference(x, h_0, r_0, u_0, params, dt=0.001)
    for o, ref in zip(outs, refs):
        assert o.shape == ref.shape, (o.shape, ref.shape)
        assert jnp.allclose(o, ref, rtol=2e-2, atol=2e-2), float(jnp.max(jnp.abs(o - ref)))

    print("KERNEL_OK")
</pallas_src>

<mosaic_0001>
module attributes {stable_mosaic.version = 11 : i64} {
  func.func @_rnn_kernel(%arg0: i32, %arg1: memref<8x8x128xf32, #tpu.memory_space<vmem>>, %arg2: memref<8x128xf32, #tpu.memory_space<vmem>>, %arg3: memref<8x128xf32, #tpu.memory_space<vmem>>, %arg4: memref<8x128xf32, #tpu.memory_space<vmem>>, %arg5: memref<1x128xf32, #tpu.memory_space<vmem>>, %arg6: memref<128x128xf32, #tpu.memory_space<vmem>>, %arg7: memref<8x8x128xf32, #tpu.memory_space<vmem>>, %arg8: memref<8x8x128xf32, #tpu.memory_space<vmem>>, %arg9: memref<8x8x128xf32, #tpu.memory_space<vmem>>, %arg10: memref<8x128xf32, #tpu.memory_space<vmem>>, %arg11: memref<8x128xf32, #tpu.memory_space<vmem>>, %arg12: memref<8x128xf32, #tpu.memory_space<vmem>>, %arg13: memref<8x128xf32, #tpu.memory_space<vmem>>) attributes {dimension_semantics = [#tpu.dimension_semantics<arbitrary>], iteration_bounds = array<i64: 1>, scalar_prefetch = 0 : i64, scratch_operands = 4 : i64, tpu.core_type = #tpu.core_type<tc>, window_params = [{transform_indices = @transform_0, window_bounds = array<i64: 8, 8, 128>}, {pipeline_mode = #tpu.pipeline_mode<synchronous>, transform_indices = @transform_1, window_bounds = array<i64: 8, 128>}, {pipeline_mode = #tpu.pipeline_mode<synchronous>, transform_indices = @transform_2, window_bounds = array<i64: 8, 128>}, {pipeline_mode = #tpu.pipeline_mode<synchronous>, transform_indices = @transform_3, window_bounds = array<i64: 8, 128>}, {pipeline_mode = #tpu.pipeline_mode<synchronous>, transform_indices = @transform_4, window_bounds = array<i64: 1, 128>}, {pipeline_mode = #tpu.pipeline_mode<synchronous>, transform_indices = @transform_5, window_bounds = array<i64: 128, 128>}, {transform_indices = @transform_6, window_bounds = array<i64: 8, 8, 128>}, {transform_indices = @transform_7, window_bounds = array<i64: 8, 8, 128>}, {transform_indices = @transform_8, window_bounds = array<i64: 8, 8, 128>}]} {
    %c0_i32 = arith.constant 0 : i32
    %0 = arith.cmpi eq, %arg0, %c0_i32 : i32
    %1 = arith.extui %0 : i1 to i32
    %c0_i32_0 = arith.constant 0 : i32
    %2 = arith.cmpi ne, %1, %c0_i32_0 : i32
    scf.if %2 {
      %c0_292 = arith.constant 0 : index
      %c0_293 = arith.constant 0 : index
      %509 = vector.load %arg2[%c0_292, %c0_293] : memref<8x128xf32, #tpu.memory_space<vmem>>, vector<8x128xf32>
      %c0_294 = arith.constant 0 : index
      %c0_295 = arith.constant 0 : index
      %510 = vector.load %arg10[%c0_294, %c0_295] : memref<8x128xf32, #tpu.memory_space<vmem>>, vector<8x128xf32>
      tpu.vector_store %arg10[%c0_294, %c0_295], %509 {strides = array<i32>} : memref<8x128xf32, #tpu.memory_space<vmem>>, vector<8x128xf32>,
      %511 = math.tanh %509 : vector<8x128xf32>
      %c0_296 = arith.constant 0 : index
      %c0_297 = arith.constant 0 : index
      %512 = vector.load %arg11[%c0_296, %c0_297] : memref<8x128xf32, #tpu.memory_space<vmem>>, vector<8x128xf32>
      tpu.vector_store %arg11[%c0_296, %c0_297], %511 {strides = array<i32>} : memref<8x128xf32, #tpu.memory_space<vmem>>, vector<8x128xf32>,
      %c0_298 = arith.constant 0 : index
      %c0_299 = arith.constant 0 : index
      %513 = vector.load %arg3[%c0_298, %c0_299] : memref<8x128xf32, #tpu.memory_space<vmem>>, vector<8x128xf32>
      %c0_300 = arith.constant 0 : index
      %c0_301 = arith.constant 0 : index
      %514 = vector.load %arg12[%c0_300, %c0_301] : memref<8x128xf32, #tpu.memory_space<vmem>>, vector<8x128xf32>
      tpu.vector_store %arg12[%c0_300, %c0_301], %513 {strides = array<i32>} : memref<8x128xf32, #tpu.memory_space<vmem>>, vector<8x128xf32>,
      %c0_302 = arith.constant 0 : index
      %c0_303 = arith.constant 0 : index
      %515 = vector.load %arg4[%c0_302, %c0_303] : memref<8x128xf32, #tpu.memory_space<vmem>>, vector<8x128xf32>
      %c0_304 = arith.constant 0 : index
      %c0_305 = arith.constant 0 : index
      %516 = vector.load %arg13[%c0_304, %c0_305] : memref<8x128xf32, #tpu.memory_space<vmem>>, vector<8x128xf32>
      tpu.vector_store %arg13[%c0_304, %c0_305], %515 {strides = array<i32>} : memref<8x128xf32, #tpu.memory_space<vmem>>, vector<8x128xf32>,
    } else {
    }
    %c0 = arith.constant 0 : index
    %c0_1 = arith.constant 0 : index
    %3 = vector.load %arg5[%c0, %c0_1] : memref<1x128xf32, #tpu.memory_space<vmem>>, vector<1x128xf32>
    %c0_2 = arith.constant 0 : index
    %c0_3 = arith.constant 0 : index
    %4 = vector.load %arg6[%c0_2, %c0_3] : memref<128x128xf32, #tpu.memory_space<vmem>>, vector<128x128xf32>
    %c0_i32_4 = arith.constant 0 : i32
    %c0_5 = arith.constant 0 : index
    %c0_6 = arith.constant 0 : index
    %5 = vector.load %arg10[%c0_5, %c0_6] : memref<8x128xf32, #tpu.memory_space<vmem>>, vector<8x128xf32>
    %c0_7 = arith.constant 0 : index
    %c0_8 = arith.constant 0 : index
    %6 = vector.load %arg11[%c0_7, %c0_8] : memref<8x128xf32, #tpu.memory_space<vmem>>, vector<8x128xf32>
    %c0_9 = arith.constant 0 : index
    %c0_10 = arith.constant 0 : index
    %7 = vector.load %arg12[%c0_9, %c0_10] : memref<8x128xf32, #tpu.memory_space<vmem>>, vector<8x128xf32>
    %c0_11 = arith.constant 0 : index
    %c0_12 = arith.constant 0 : index
    %8 = vector.load %arg13[%c0_11, %c0_12] : memref<8x128xf32, #tpu.memory_space<vmem>>, vector<8x128xf32>
    %cst = arith.constant 1.000000e+00 : f32
    %9 = vector.broadcast %cst : f32 to vector<8x128xf32>
    %10 = arith.subf %9, %7 : vector<8x128xf32>
    %cst_13 = arith.constant 5.000000e-03 : f32
    %11 = vector.broadcast %cst_13 : f32 to vector<8x128xf32>
    %12 = arith.mulf %10, %11 : vector<8x128xf32>
    %13 = arith.addf %7, %12 : vector<8x128xf32>
    %14 = arith.mulf %8, %7 : vector<8x128xf32>
    %15 = arith.mulf %14, %6 : vector<8x128xf32>
    %cst_14 = arith.constant 2.000000e-02 : f32
    %16 = vector.broadcast %cst_14 : f32 to vector<8x128xf32>
    %17 = arith.mulf %16, %15 : vector<8x128xf32>
    %18 = arith.subf %13, %17 : vector<8x128xf32>
    %cst_15 = arith.constant 0.000000e+00 : f32
    %cst_16 = arith.constant 1.000000e+00 : f32
    %19 = vector.broadcast %cst_15 : f32 to vector<8x128xf32>
    %20 = arith.maximumf %19, %18 : vector<8x128xf32>
    %21 = vector.broadcast %cst_16 : f32 to vector<8x128xf32>
    %22 = arith.minimumf %21, %20 : vector<8x128xf32>
    %23 = vector.broadcast %3 : vector<1x128xf32> to vector<8x128xf32>
    %24 = arith.subf %23, %8 : vector<8x128xf32>
    %cst_17 = arith.constant 6.66666659E-4 : f32
    %25 = vector.broadcast %cst_17 : f32 to vector<8x128xf32>
    %26 = arith.mulf %24, %25 : vector<8x128xf32>
    %27 = arith.addf %8, %26 : vector<8x128xf32>
    %cst_18 = arith.constant 1.000000e+00 : f32
    %28 = vector.broadcast %cst_18 : f32 to vector<8x128xf32>
    %29 = arith.subf %28, %8 : vector<8x128xf32>
    %30 = vector.broadcast %3 : vector<1x128xf32> to vector<8x128xf32>
    %31 = arith.mulf %30, %29 : vector<8x128xf32>
    %32 = arith.mulf %31, %6 : vector<8x128xf32>
    %cst_19 = arith.constant 2.000000e-02 : f32
    %33 = vector.broadcast %cst_19 : f32 to vector<8x128xf32>
    %34 = arith.mulf %33, %32 : vector<8x128xf32>
    %35 = arith.addf %27, %34 : vector<8x128xf32>
    %cst_20 = arith.constant 0.000000e+00 : f32
    %cst_21 = arith.constant 1.000000e+00 : f32
    %36 = vector.broadcast %cst_20 : f32 to vector<8x128xf32>
    %37 = arith.maximumf %36, %35 : vector<8x128xf32>
    %38 = vector.broadcast %cst_21 : f32 to vector<8x128xf32>
    %39 = arith.minimumf %38, %37 : vector<8x128xf32>
    %40 = arith.index_cast %c0_i32_4 : i32 to index
    %c0_22 = arith.constant 0 : index
    %c0_23 = arith.constant 0 : index
    %41 = vector.load %arg8[%40, %c0_22, %c0_23] : memref<8x8x128xf32, #tpu.memory_space<vmem>>, vector<1x8x128xf32>
    %42 = vector.shape_cast %41 : vector<1x8x128xf32> to vector<8x128xf32>
    %43 = vector.shape_cast %22 : vector<8x128xf32> to vector<1x8x128xf32>
    tpu.vector_store %arg8[%40, %c0_22, %c0_23], %43 {strides = array<i32>} : memref<8x8x128xf32, #tpu.memory_space<vmem>>, vector<1x8x128xf32>,
    %44 = arith.index_cast %c0_i32_4 : i32 to index
    %c0_24 = arith.constant 0 : index
    %c0_25 = arith.constant 0 : index
    %45 = vector.load %arg9[%44, %c0_24, %c0_25] : memref<8x8x128xf32, #tpu.memory_space<vmem>>, vector<1x8x128xf32>
    %46 = vector.shape_cast %45 : vector<1x8x128xf32> to vector<8x128xf32>
    %47 = vector.shape_cast %39 : vector<8x128xf32> to vector<1x8x128xf32>
    tpu.vector_store %arg9[%44, %c0_24, %c0_25], %47 {strides = array<i32>} : memref<8x8x128xf32, #tpu.memory_space<vmem>>, vector<1x8x128xf32>,
    %c0_26 = arith.constant 0 : index
    %c0_27 = arith.constant 0 : index
    %48 = vector.load %arg12[%c0_26, %c0_27] : memref<8x128xf32, #tpu.memory_space<vmem>>, vector<8x128xf32>
    tpu.vector_store %arg12[%c0_26, %c0_27], %22 {strides = array<i32>} : memref<8x128xf32, #tpu.memory_space<vmem>>, vector<8x128xf32>,
    %c0_28 = arith.constant 0 : index
    %c0_29 = arith.constant 0 : index
    %49 = vector.load %arg13[%c0_28, %c0_29] : memref<8x128xf32, #tpu.memory_space<vmem>>, vector<8x128xf32>
    tpu.vector_store %arg13[%c0_28, %c0_29], %39 {strides = array<i32>} : memref<8x128xf32, #tpu.memory_space<vmem>>, vector<8x128xf32>,
    %50 = arith.mulf %7, %8 : vector<8x128xf32>
    %51 = arith.mulf %6, %50 : vector<8x128xf32>
    %cst_30 = arith.constant dense<0.000000e+00> : vector<8x128xf32>
    %52 = tpu.matmul %51, %4, %cst_30 {dimension_numbers = #tpu.dot_dimension_numbers<[1], [0], [0], [1], [0, 0, 1, 1], [], []>} : vector<8x128xf32>, vector<128x128xf32>, vector<8x128xf32> -> vector<8x128xf32>
    %53 = arith.index_cast %c0_i32_4 : i32 to index
    %c0_31 = arith.constant 0 : index
    %c0_32 = arith.constant 0 : index
    %54 = vector.load %arg1[%53, %c0_31, %c0_32] : memref<8x8x128xf32, #tpu.memory_space<vmem>>, vector<1x8x128xf32>
    %55 = vector.shape_cast %54 : vector<1x8x128xf32> to vector<8x128xf32>
    %56 = arith.addf %55, %52 : vector<8x128xf32>
    %57 = arith.subf %56, %5 : vector<8x128xf32>
    %cst_33 = arith.constant 1.000000e-01 : f32
    %58 = vector.broadcast %cst_33 : f32 to vector<8x128xf32>
    %59 = arith.mulf %57, %58 : vector<8x128xf32>
    %60 = arith.addf %5, %59 : vector<8x128xf32>
    %61 = arith.index_cast %c0_i32_4 : i32 to index
    %c0_34 = arith.constant 0 : index
    %c0_35 = arith.constant 0 : index
    %62 = vector.load %arg7[%61, %c0_34, %c0_35] : memref<8x8x128xf32, #tpu.memory_space<vmem>>, vector<1x8x128xf32>
    %63 = vector.shape_cast %62 : vector<1x8x128xf32> to vector<8x128xf32>
    %64 = vector.shape_cast %60 : vector<8x128xf32> to vector<1x8x128xf32>
    tpu.vector_store %arg7[%61, %c0_34, %c0_35], %64 {strides = array<i32>} : memref<8x8x128xf32, #tpu.memory_space<vmem>>, vector<1x8x128xf32>,
    %c0_36 = arith.constant 0 : index
    %c0_37 = arith.constant 0 : index
    %65 = vector.load %arg10[%c0_36, %c0_37] : memref<8x128xf32, #tpu.memory_space<vmem>>, vector<8x128xf32>
    tpu.vector_store %arg10[%c0_36, %c0_37], %60 {strides = array<i32>} : memref<8x128xf32, #tpu.memory_space<vmem>>, vector<8x128xf32>,
    %66 = math.tanh %60 : vector<8x128xf32>
    %c0_38 = arith.constant 0 : index
    %c0_39 = arith.constant 0 : index
    %67 = vector.load %arg11[%c0_38, %c0_39] : memref<8x128xf32, #tpu.memory_space<vmem>>, vector<8x128xf32>
    tpu.vector_store %arg11[%c0_38, %c0_39], %66 {strides = array<i32>} : memref<8x128xf32, #tpu.memory_space<vmem>>, vector<8x128xf32>,
    %c1_i32 = arith.constant 1 : i32
    %c0_40 = arith.constant 0 : index
    %c0_41 = arith.constant 0 : index
    %68 = vector.load %arg10[%c0_40, %c0_41] : memref<8x128xf32, #tpu.memory_space<vmem>>, vector<8x128xf32>
    %c0_42 = arith.constant 0 : index
    %c0_43 = arith.constant 0 : index
    %69 = vector.load %arg11[%c0_42, %c0_43] : memref<8x128xf32, #tpu.memory_space<vmem>>, vector<8x128xf32>
    %c0_44 = arith.constant 0 : index
    %c0_45 = arith.constant 0 : index
    %70 = vector.load %arg12[%c0_44, %c0_45] : memref<8x128xf32, #tpu.memory_space<vmem>>, vector<8x128xf32>
    %c0_46 = arith.constant 0 : index
    %c0_47 = arith.constant 0 : index
    %71 = vector.load %arg13[%c0_46, %c0_47] : memref<8x128xf32, #tpu.memory_space<vmem>>, vector<8x128xf32>
    %cst_48 = arith.constant 1.000000e+00 : f32
    %72 = vector.broadcast %cst_48 : f32 to vector<8x128xf32>
    %73 = arith.subf %72, %70 : vector<8x128xf32>
    %cst_49 = arith.constant 5.000000e-03 : f32
    %74 = vector.broadcast %cst_49 : f32 to vector<8x128xf32>
    %75 = arith.mulf %73, %74 : vector<8x128xf32>
    %76 = arith.addf %70, %75 : vector<8x128xf32>
    %77 = arith.mulf %71, %70 : vector<8x128xf32>
    %78 = arith.mulf %77, %69 : vector<8x128xf32>
    %cst_50 = arith.constant 2.000000e-02 : f32
    %79 = vector.broadcast %cst_50 : f32 to vector<8x128xf32>
    %80 = arith.mulf %79, %78 : vector<8x128xf32>
    %81 = arith.subf %76, %80 : vector<8x128xf32>
    %cst_51 = arith.constant 0.000000e+00 : f32
    %cst_52 = arith.constant 1.000000e+00 : f32
    %82 = vector.broadcast %cst_51 : f32 to vector<8x128xf32>
    %83 = arith.maximumf %82, %81 : vector<8x128xf32>
    %84 = vector.broadcast %cst_52 : f32 to vector<8x128xf32>
    %85 = arith.minimumf %84, %83 : vector<8x128xf32>
    %86 = vector.broadcast %3 : vector<1x128xf32> to vector<8x128xf32>
    %87 = arith.subf %86, %71 : vector<8x128xf32>
    %cst_53 = arith.constant 6.66666659E-4 : f32
    %88 = vector.broadcast %cst_53 : f32 to vector<8x128xf32>
    %89 = arith.mulf %87, %88 : vector<8x128xf32>
    %90 = arith.addf %71, %89 : vector<8x128xf32>
    %cst_54 = arith.constant 1.000000e+00 : f32
    %91 = vector.broadcast %cst_54 : f32 to vector<8x128xf32>
    %92 = arith.subf %91, %71 : vector<8x128xf32>
    %93 = vector.broadcast %3 : vector<1x128xf32> to vector<8x128xf32>
    %94 = arith.mulf %93, %92 : vector<8x128xf32>
    %95 = arith.mulf %94, %69 : vector<8x128xf32>
    %cst_55 = arith.constant 2.000000e-02 : f32
    %96 = vector.broadcast %cst_55 : f32 to vector<8x128xf32>
    %97 = arith.mulf %96, %95 : vector<8x128xf32>
    %98 = arith.addf %90, %97 : vector<8x128xf32>
    %cst_56 = arith.constant 0.000000e+00 : f32
    %cst_57 = arith.constant 1.000000e+00 : f32
    %99 = vector.broadcast %cst_56 : f32 to vector<8x128xf32>
    %100 = arith.maximumf %99, %98 : vector<8x128xf32>
    %101 = vector.broadcast %cst_57 : f32 to vector<8x128xf32>
    %102 = arith.minimumf %101, %100 : vector<8x128xf32>
    %103 = arith.index_cast %c1_i32 : i32 to index
    %c0_58 = arith.constant 0 : index
    %c0_59 = arith.constant 0 : index
    %104 = vector.load %arg8[%103, %c0_58, %c0_59] : memref<8x8x128xf32, #tpu.memory_space<vmem>>, vector<1x8x128xf32>
    %105 = vector.shape_cast %104 : vector<1x8x128xf32> to vector<8x128xf32>
    %106 = vector.shape_cast %85 : vector<8x128xf32> to vector<1x8x128xf32>
    tpu.vector_store %arg8[%103, %c0_58, %c0_59], %106 {strides = array<i32>} : memref<8x8x128xf32, #tpu.memory_space<vmem>>, vector<1x8x128xf32>,
    %107 = arith.index_cast %c1_i32 : i32 to index
    %c0_60 = arith.constant 0 : index
    %c0_61 = arith.constant 0 : index
    %108 = vector.load %arg9[%107, %c0_60, %c0_61] : memref<8x8x128xf32, #tpu.memory_space<vmem>>, vector<1x8x128xf32>
    %109 = vector.shape_cast %108 : vector<1x8x128xf32> to vector<8x128xf32>
    %110 = vector.shape_cast %102 : vector<8x128xf32> to vector<1x8x128xf32>
    tpu.vector_store %arg9[%107, %c0_60, %c0_61], %110 {strides = array<i32>} : memref<8x8x128xf32, #tpu.memory_space<vmem>>, vector<1x8x128xf32>,
    %c0_62 = arith.constant 0 : index
    %c0_63 = arith.constant 0 : index
    %111 = vector.load %arg12[%c0_62, %c0_63] : memref<8x128xf32, #tpu.memory_space<vmem>>, vector<8x128xf32>
    tpu.vector_store %arg12[%c0_62, %c0_63], %85 {strides = array<i32>} : memref<8x128xf32, #tpu.memory_space<vmem>>, vector<8x128xf32>,
    %c0_64 = arith.constant 0 : index
    %c0_65 = arith.constant 0 : index
    %112 = vector.load %arg13[%c0_64, %c0_65] : memref<8x128xf32, #tpu.memory_space<vmem>>, vector<8x128xf32>
    tpu.vector_store %arg13[%c0_64, %c0_65], %102 {strides = array<i32>} : memref<8x128xf32, #tpu.memory_space<vmem>>, vector<8x128xf32>,
    %113 = arith.mulf %70, %71 : vector<8x128xf32>
    %114 = arith.mulf %69, %113 : vector<8x128xf32>
    %cst_66 = arith.constant dense<0.000000e+00> : vector<8x128xf32>
    %115 = tpu.matmul %114, %4, %cst_66 {dimension_numbers = #tpu.dot_dimension_numbers<[1], [0], [0], [1], [0, 0, 1, 1], [], []>} : vector<8x128xf32>, vector<128x128xf32>, vector<8x128xf32> -> vector<8x128xf32>
    %116 = arith.index_cast %c1_i32 : i32 to index
    %c0_67 = arith.constant 0 : index
    %c0_68 = arith.constant 0 : index
    %117 = vector.load %arg1[%116, %c0_67, %c0_68] : memref<8x8x128xf32, #tpu.memory_space<vmem>>, vector<1x8x128xf32>
    %118 = vector.shape_cast %117 : vector<1x8x128xf32> to vector<8x128xf32>
    %119 = arith.addf %118, %115 : vector<8x128xf32>
    %120 = arith.subf %119, %68 : vector<8x128xf32>
    %cst_69 = arith.constant 1.000000e-01 : f32
    %121 = vector.broadcast %cst_69 : f32 to vector<8x128xf32>
    %122 = arith.mulf %120, %121 : vector<8x128xf32>
    %123 = arith.addf %68, %122 : vector<8x128xf32>
    %124 = arith.index_cast %c1_i32 : i32 to index
    %c0_70 = arith.constant 0 : index
    %c0_71 = arith.constant 0 : index
    %125 = vector.load %arg7[%124, %c0_70, %c0_71] : memref<8x8x128xf32, #tpu.memory_space<vmem>>, vector<1x8x128xf32>
    %126 = vector.shape_cast %125 : vector<1x8x128xf32> to vector<8x128xf32>
    %127 = vector.shape_cast %123 : vector<8x128xf32> to vector<1x8x128xf32>
    tpu.vector_store %arg7[%124, %c0_70, %c0_71], %127 {strides = array<i32>} : memref<8x8x128xf32, #tpu.memory_space<vmem>>, vector<1x8x128xf32>,
    %c0_72 = arith.constant 0 : index
    %c0_73 = arith.constant 0 : index
    %128 = vector.load %arg10[%c0_72, %c0_73] : memref<8x128xf32, #tpu.memory_space<vmem>>, vector<8x128xf32>
    tpu.vector_store %arg10[%c0_72, %c0_73], %123 {strides = array<i32>} : memref<8x128xf32, #tpu.memory_space<vmem>>, vector<8x128xf32>,
    %129 = math.tanh %123 : vector<8x128xf32>
    %c0_74 = arith.constant 0 : index
    %c0_75 = arith.constant 0 : index
    %130 = vector.load %arg11[%c0_74, %c0_75] : memref<8x128xf32, #tpu.memory_space<vmem>>, vector<8x128xf32>
    tpu.vector_store %arg11[%c0_74, %c0_75], %129 {strides = array<i32>} : memref<8x128xf32, #tpu.memory_space<vmem>>, vector<8x128xf32>,
    %c2_i32 = arith.constant 2 : i32
    %c0_76 = arith.constant 0 : index
    %c0_77 = arith.constant 0 : index
    %131 = vector.load %arg10[%c0_76, %c0_77] : memref<8x128xf32, #tpu.memory_space<vmem>>, vector<8x128xf32>
    %c0_78 = arith.constant 0 : index
    %c0_79 = arith.constant 0 : index
    %132 = vector.load %arg11[%c0_78, %c0_79] : memref<8x128xf32, #tpu.memory_space<vmem>>, vector<8x128xf32>
    %c0_80 = arith.constant 0 : index
    %c0_81 = arith.constant 0 : index
    %133 = vector.load %arg12[%c0_80, %c0_81] : memref<8x128xf32, #tpu.memory_space<vmem>>, vector<8x128xf32>
    %c0_82 = arith.constant 0 : index
    %c0_83 = arith.constant 0 : index
    %134 = vector.load %arg13[%c0_82, %c0_83] : memref<8x128xf32, #tpu.memory_space<vmem>>, vector<8x128xf32>
    %cst_84 = arith.constant 1.000000e+00 : f32
    %135 = vector.broadcast %cst_84 : f32 to vector<8x128xf32>
    %136 = arith.subf %135, %133 : vector<8x128xf32>
    %cst_85 = arith.constant 5.000000e-03 : f32
    %137 = vector.broadcast %cst_85 : f32 to vector<8x128xf32>
    %138 = arith.mulf %136, %137 : vector<8x128xf32>
    %139 = arith.addf %133, %138 : vector<8x128xf32>
    %140 = arith.mulf %134, %133 : vector<8x128xf32>
    %141 = arith.mulf %140, %132 : vector<8x128xf32>
    %cst_86 = arith.constant 2.000000e-02 : f32
    %142 = vector.broadcast %cst_86 : f32 to vector<8x128xf32>
    %143 = arith.mulf %142, %141 : vector<8x128xf32>
    %144 = arith.subf %139, %143 : vector<8x128xf32>
    %cst_87 = arith.constant 0.000000e+00 : f32
    %cst_88 = arith.constant 1.000000e+00 : f32
    %145 = vector.broadcast %cst_87 : f32 to vector<8x128xf32>
    %146 = arith.maximumf %145, %144 : vector<8x128xf32>
    %147 = vector.broadcast %cst_88 : f32 to vector<8x128xf32>
    %148 = arith.minimumf %147, %146 : vector<8x128xf32>
    %149 = vector.broadcast %3 : vector<1x128xf32> to vector<8x128xf32>
    %150 = arith.subf %149, %134 : vector<8x128xf32>
    %cst_89 = arith.constant 6.66666659E-4 : f32
    %151 = vector.broadcast %cst_89 : f32 to vector<8x128xf32>
    %152 = arith.mulf %150, %151 : vector<8x128xf32>
    %153 = arith.addf %134, %152 : vector<8x128xf32>
    %cst_90 = arith.constant 1.000000e+00 : f32
    %154 = vector.broadcast %cst_90 : f32 to vector<8x128xf32>
    %155 = arith.subf %154, %134 : vector<8x128xf32>
    %156 = vector.broadcast %3 : vector<1x128xf32> to vector<8x128xf32>
    %157 = arith.mulf %156, %155 : vector<8x128xf32>
    %158 = arith.mulf %157, %132 : vector<8x128xf32>
    %cst_91 = arith.constant 2.000000e-02 : f32
    %159 = vector.broadcast %cst_91 : f32 to vector<8x128xf32>
    %160 = arith.mulf %159, %158 : vector<8x128xf32>
    %161 = arith.addf %153, %160 : vector<8x128xf32>
    %cst_92 = arith.constant 0.000000e+00 : f32
    %cst_93 = arith.constant 1.000000e+00 : f32
    %162 = vector.broadcast %cst_92 : f32 to vector<8x128xf32>
    %163 = arith.maximumf %162, %161 : vector<8x128xf32>
    %164 = vector.broadcast %cst_93 : f32 to vector<8x128xf32>
    %165 = arith.minimumf %164, %163 : vector<8x128xf32>
    %166 = arith.index_cast %c2_i32 : i32 to index
    %c0_94 = arith.constant 0 : index
    %c0_95 = arith.constant 0 : index
    %167 = vector.load %arg8[%166, %c0_94, %c0_95] : memref<8x8x128xf32, #tpu.memory_space<vmem>>, vector<1x8x128xf32>
    %168 = vector.shape_cast %167 : vector<1x8x128xf32> to vector<8x128xf32>
    %169 = vector.shape_cast %148 : vector<8x128xf32> to vector<1x8x128xf32>
    tpu.vector_store %arg8[%166, %c0_94, %c0_95], %169 {strides = array<i32>} : memref<8x8x128xf32, #tpu.memory_space<vmem>>, vector<1x8x128xf32>,
    %170 = arith.index_cast %c2_i32 : i32 to index
    %c0_96 = arith.constant 0 : index
    %c0_97 = arith.constant 0 : index
    %171 = vector.load %arg9[%170, %c0_96, %c0_97] : memref<8x8x128xf32, #tpu.memory_space<vmem>>, vector<1x8x128xf32>
    %172 = vector.shape_cast %171 : vector<1x8x128xf32> to vector<8x128xf32>
    %173 = vector.shape_cast %165 : vector<8x128xf32> to vector<1x8x128xf32>
    tpu.vector_store %arg9[%170, %c0_96, %c0_97], %173 {strides = array<i32>} : memref<8x8x128xf32, #tpu.memory_space<vmem>>, vector<1x8x128xf32>,
    %c0_98 = arith.constant 0 : index
    %c0_99 = arith.constant 0 : index
    %174 = vector.load %arg12[%c0_98, %c0_99] : memref<8x128xf32, #tpu.memory_space<vmem>>, vector<8x128xf32>
    tpu.vector_store %arg12[%c0_98, %c0_99], %148 {strides = array<i32>} : memref<8x128xf32, #tpu.memory_space<vmem>>, vector<8x128xf32>,
    %c0_100 = arith.constant 0 : index
    %c0_101 = arith.constant 0 : index
    %175 = vector.load %arg13[%c0_100, %c0_101] : memref<8x128xf32, #tpu.memory_space<vmem>>, vector<8x128xf32>
    tpu.vector_store %arg13[%c0_100, %c0_101], %165 {strides = array<i32>} : memref<8x128xf32, #tpu.memory_space<vmem>>, vector<8x128xf32>,
    %176 = arith.mulf %133, %134 : vector<8x128xf32>
    %177 = arith.mulf %132, %176 : vector<8x128xf32>
    %cst_102 = arith.constant dense<0.000000e+00> : vector<8x128xf32>
    %178 = tpu.matmul %177, %4, %cst_102 {dimension_numbers = #tpu.dot_dimension_numbers<[1], [0], [0], [1], [0, 0, 1, 1], [], []>} : vector<8x128xf32>, vector<128x128xf32>, vector<8x128xf32> -> vector<8x128xf32>
    %179 = arith.index_cast %c2_i32 : i32 to index
    %c0_103 = arith.constant 0 : index
    %c0_104 = arith.constant 0 : index
    %180 = vector.load %arg1[%179, %c0_103, %c0_104] : memref<8x8x128xf32, #tpu.memory_space<vmem>>, vector<1x8x128xf32>
    %181 = vector.shape_cast %180 : vector<1x8x128xf32> to vector<8x128xf32>
    %182 = arith.addf %181, %178 : vector<8x128xf32>
    %183 = arith.subf %182, %131 : vector<8x128xf32>
    %cst_105 = arith.constant 1.000000e-01 : f32
    %184 = vector.broadcast %cst_105 : f32 to vector<8x128xf32>
    %185 = arith.mulf %183, %184 : vector<8x128xf32>
    %186 = arith.addf %131, %185 : vector<8x128xf32>
    %187 = arith.index_cast %c2_i32 : i32 to index
    %c0_106 = arith.constant 0 : index
    %c0_107 = arith.constant 0 : index
    %188 = vector.load %arg7[%187, %c0_106, %c0_107] : memref<8x8x128xf32, #tpu.memory_space<vmem>>, vector<1x8x128xf32>
    %189 = vector.shape_cast %188 : vector<1x8x128xf32> to vector<8x128xf32>
    %190 = vector.shape_cast %186 : vector<8x128xf32> to vector<1x8x128xf32>
    tpu.vector_store %arg7[%187, %c0_106, %c0_107], %190 {strides = array<i32>} : memref<8x8x128xf32, #tpu.memory_space<vmem>>, vector<1x8x128xf32>,
    %c0_108 = arith.constant 0 : index
    %c0_109 = arith.constant 0 : index
    %191 = vector.load %arg10[%c0_108, %c0_109] : memref<8x128xf32, #tpu.memory_space<vmem>>, vector<8x128xf32>
    tpu.vector_store %arg10[%c0_108, %c0_109], %186 {strides = array<i32>} : memref<8x128xf32, #tpu.memory_space<vmem>>, vector<8x128xf32>,
    %192 = math.tanh %186 : vector<8x128xf32>
    %c0_110 = arith.constant 0 : index
    %c0_111 = arith.constant 0 : index
    %193 = vector.load %arg11[%c0_110, %c0_111] : memref<8x128xf32, #tpu.memory_space<vmem>>, vector<8x128xf32>
    tpu.vector_store %arg11[%c0_110, %c0_111], %192 {strides = array<i32>} : memref<8x128xf32, #tpu.memory_space<vmem>>, vector<8x128xf32>,
    %c3_i32 = arith.constant 3 : i32
    %c0_112 = arith.constant 0 : index
    %c0_113 = arith.constant 0 : index
    %194 = vector.load %arg10[%c0_112, %c0_113] : memref<8x128xf32, #tpu.memory_space<vmem>>, vector<8x128xf32>
    %c0_114 = arith.constant 0 : index
    %c0_115 = arith.constant 0 : index
    %195 = vector.load %arg11[%c0_114, %c0_115] : memref<8x128xf32, #tpu.memory_space<vmem>>, vector<8x128xf32>
    %c0_116 = arith.constant 0 : index
    %c0_117 = arith.constant 0 : index
    %196 = vector.load %arg12[%c0_116, %c0_117] : memref<8x128xf32, #tpu.memory_space<vmem>>, vector<8x128xf32>
    %c0_118 = arith.constant 0 : index
    %c0_119 = arith.constant 0 : index
    %197 = vector.load %arg13[%c0_118, %c0_119] : memref<8x128xf32, #tpu.memory_space<vmem>>, vector<8x128xf32>
    %cst_120 = arith.constant 1.000000e+00 : f32
    %198 = vector.broadcast %cst_120 : f32 to vector<8x128xf32>
    %199 = arith.subf %198, %196 : vector<8x128xf32>
    %cst_121 = arith.constant 5.000000e-03 : f32
    %200 = vector.broadcast %cst_121 : f32 to vector<8x128xf32>
    %201 = arith.mulf %199, %200 : vector<8x128xf32>
    %202 = arith.addf %196, %201 : vector<8x128xf32>
    %203 = arith.mulf %197, %196 : vector<8x128xf32>
    %204 = arith.mulf %203, %195 : vector<8x128xf32>
    %cst_122 = arith.constant 2.000000e-02 : f32
    %205 = vector.broadcast %cst_122 : f32 to vector<8x128xf32>
    %206 = arith.mulf %205, %204 : vector<8x128xf32>
    %207 = arith.subf %202, %206 : vector<8x128xf32>
    %cst_123 = arith.constant 0.000000e+00 : f32
    %cst_124 = arith.constant 1.000000e+00 : f32
    %208 = vector.broadcast %cst_123 : f32 to vector<8x128xf32>
    %209 = arith.maximumf %208, %207 : vector<8x128xf32>
    %210 = vector.broadcast %cst_124 : f32 to vector<8x128xf32>
    %211 = arith.minimumf %210, %209 : vector<8x128xf32>
    %212 = vector.broadcast %3 : vector<1x128xf32> to vector<8x128xf32>
    %213 = arith.subf %212, %197 : vector<8x128xf32>
    %cst_125 = arith.constant 6.66666659E-4 : f32
    %214 = vector.broadcast %cst_125 : f32 to vector<8x128xf32>
    %215 = arith.mulf %213, %214 : vector<8x128xf32>
    %216 = arith.addf %197, %215 : vector<8x128xf32>
    %cst_126 = arith.constant 1.000000e+00 : f32
    %217 = vector.broadcast %cst_126 : f32 to vector<8x128xf32>
    %218 = arith.subf %217, %197 : vector<8x128xf32>
    %219 = vector.broadcast %3 : vector<1x128xf32> to vector<8x128xf32>
    %220 = arith.mulf %219, %218 : vector<8x128xf32>
    %221 = arith.mulf %220, %195 : vector<8x128xf32>
    %cst_127 = arith.constant 2.000000e-02 : f32
    %222 = vector.broadcast %cst_127 : f32 to vector<8x128xf32>
    %223 = arith.mulf %222, %221 : vector<8x128xf32>
    %224 = arith.addf %216, %223 : vector<8x128xf32>
    %cst_128 = arith.constant 0.000000e+00 : f32
    %cst_129 = arith.constant 1.000000e+00 : f32
    %225 = vector.broadcast %cst_128 : f32 to vector<8x128xf32>
    %226 = arith.maximumf %225, %224 : vector<8x128xf32>
    %227 = vector.broadcast %cst_129 : f32 to vector<8x128xf32>
    %228 = arith.minimumf %227, %226 : vector<8x128xf32>
    %229 = arith.index_cast %c3_i32 : i32 to index
    %c0_130 = arith.constant 0 : index
    %c0_131 = arith.constant 0 : index
    %230 = vector.load %arg8[%229, %c0_130, %c0_131] : memref<8x8x128xf32, #tpu.memory_space<vmem>>, vector<1x8x128xf32>
    %231 = vector.shape_cast %230 : vector<1x8x128xf32> to vector<8x128xf32>
    %232 = vector.shape_cast %211 : vector<8x128xf32> to vector<1x8x128xf32>
    tpu.vector_store %arg8[%229, %c0_130, %c0_131], %232 {strides = array<i32>} : memref<8x8x128xf32, #tpu.memory_space<vmem>>, vector<1x8x128xf32>,
    %233 = arith.index_cast %c3_i32 : i32 to index
    %c0_132 = arith.constant 0 : index
    %c0_133 = arith.constant 0 : index
    %234 = vector.load %arg9[%233, %c0_132, %c0_133] : memref<8x8x128xf32, #tpu.memory_space<vmem>>, vector<1x8x128xf32>
    %235 = vector.shape_cast %234 : vector<1x8x128xf32> to vector<8x128xf32>
    %236 = vector.shape_cast %228 : vector<8x128xf32> to vector<1x8x128xf32>
    tpu.vector_store %arg9[%233, %c0_132, %c0_133], %236 {strides = array<i32>} : memref<8x8x128xf32, #tpu.memory_space<vmem>>, vector<1x8x128xf32>,
    %c0_134 = arith.constant 0 : index
    %c0_135 = arith.constant 0 : index
    %237 = vector.load %arg12[%c0_134, %c0_135] : memref<8x128xf32, #tpu.memory_space<vmem>>, vector<8x128xf32>
    tpu.vector_store %arg12[%c0_134, %c0_135], %211 {strides = array<i32>} : memref<8x128xf32, #tpu.memory_space<vmem>>, vector<8x128xf32>,
    %c0_136 = arith.constant 0 : index
    %c0_137 = arith.constant 0 : index
    %238 = vector.load %arg13[%c0_136, %c0_137] : memref<8x128xf32, #tpu.memory_space<vmem>>, vector<8x128xf32>
    tpu.vector_store %arg13[%c0_136, %c0_137], %228 {strides = array<i32>} : memref<8x128xf32, #tpu.memory_space<vmem>>, vector<8x128xf32>,
    %239 = arith.mulf %196, %197 : vector<8x128xf32>
    %240 = arith.mulf %195, %239 : vector<8x128xf32>
    %cst_138 = arith.constant dense<0.000000e+00> : vector<8x128xf32>
    %241 = tpu.matmul %240, %4, %cst_138 {dimension_numbers = #tpu.dot_dimension_numbers<[1], [0], [0], [1], [0, 0, 1, 1], [], []>} : vector<8x128xf32>, vector<128x128xf32>, vector<8x128xf32> -> vector<8x128xf32>
    %242 = arith.index_cast %c3_i32 : i32 to index
    %c0_139 = arith.constant 0 : index
    %c0_140 = arith.constant 0 : index
    %243 = vector.load %arg1[%242, %c0_139, %c0_140] : memref<8x8x128xf32, #tpu.memory_space<vmem>>, vector<1x8x128xf32>
    %244 = vector.shape_cast %243 : vector<1x8x128xf32> to vector<8x128xf32>
    %245 = arith.addf %244, %241 : vector<8x128xf32>
    %246 = arith.subf %245, %194 : vector<8x128xf32>
    %cst_141 = arith.constant 1.000000e-01 : f32
    %247 = vector.broadcast %cst_141 : f32 to vector<8x128xf32>
    %248 = arith.mulf %246, %247 : vector<8x128xf32>
    %249 = arith.addf %194, %248 : vector<8x128xf32>
    %250 = arith.index_cast %c3_i32 : i32 to index
    %c0_142 = arith.constant 0 : index
    %c0_143 = arith.constant 0 : index
    %251 = vector.load %arg7[%250, %c0_142, %c0_143] : memref<8x8x128xf32, #tpu.memory_space<vmem>>, vector<1x8x128xf32>
    %252 = vector.shape_cast %251 : vector<1x8x128xf32> to vector<8x128xf32>
    %253 = vector.shape_cast %249 : vector<8x128xf32> to vector<1x8x128xf32>
    tpu.vector_store %arg7[%250, %c0_142, %c0_143], %253 {strides = array<i32>} : memref<8x8x128xf32, #tpu.memory_space<vmem>>, vector<1x8x128xf32>,
    %c0_144 = arith.constant 0 : index
    %c0_145 = arith.constant 0 : index
    %254 = vector.load %arg10[%c0_144, %c0_145] : memref<8x128xf32, #tpu.memory_space<vmem>>, vector<8x128xf32>
    tpu.vector_store %arg10[%c0_144, %c0_145], %249 {strides = array<i32>} : memref<8x128xf32, #tpu.memory_space<vmem>>, vector<8x128xf32>,
    %255 = math.tanh %249 : vector<8x128xf32>
    %c0_146 = arith.constant 0 : index
    %c0_147 = arith.constant 0 : index
    %256 = vector.load %arg11[%c0_146, %c0_147] : memref<8x128xf32, #tpu.memory_space<vmem>>, vector<8x128xf32>
    tpu.vector_store %arg11[%c0_146, %c0_147], %255 {strides = array<i32>} : memref<8x128xf32, #tpu.memory_space<vmem>>, vector<8x128xf32>,
    %c4_i32 = arith.constant 4 : i32
    %c0_148 = arith.constant 0 : index
    %c0_149 = arith.constant 0 : index
    %257 = vector.load %arg10[%c0_148, %c0_149] : memref<8x128xf32, #tpu.memory_space<vmem>>, vector<8x128xf32>
    %c0_150 = arith.constant 0 : index
    %c0_151 = arith.constant 0 : index
    %258 = vector.load %arg11[%c0_150, %c0_151] : memref<8x128xf32, #tpu.memory_space<vmem>>, vector<8x128xf32>
    %c0_152 = arith.constant 0 : index
    %c0_153 = arith.constant 0 : index
    %259 = vector.load %arg12[%c0_152, %c0_153] : memref<8x128xf32, #tpu.memory_space<vmem>>, vector<8x128xf32>
    %c0_154 = arith.constant 0 : index
    %c0_155 = arith.constant 0 : index
    %260 = vector.load %arg13[%c0_154, %c0_155] : memref<8x128xf32, #tpu.memory_space<vmem>>, vector<8x128xf32>
    %cst_156 = arith.constant 1.000000e+00 : f32
    %261 = vector.broadcast %cst_156 : f32 to vector<8x128xf32>
    %262 = arith.subf %261, %259 : vector<8x128xf32>
    %cst_157 = arith.constant 5.000000e-03 : f32
    %263 = vector.broadcast %cst_157 : f32 to vector<8x128xf32>
    %264 = arith.mulf %262, %263 : vector<8x128xf32>
    %265 = arith.addf %259, %264 : vector<8x128xf32>
    %266 = arith.mulf %260, %259 : vector<8x128xf32>
    %267 = arith.mulf %266, %258 : vector<8x128xf32>
    %cst_158 = arith.constant 2.000000e-02 : f32
    %268 = vector.broadcast %cst_158 : f32 to vector<8x128xf32>
    %269 = arith.mulf %268, %267 : vector<8x128xf32>
    %270 = arith.subf %265, %269 : vector<8x128xf32>
    %cst_159 = arith.constant 0.000000e+00 : f32
    %cst_160 = arith.constant 1.000000e+00 : f32
    %271 = vector.broadcast %cst_159 : f32 to vector<8x128xf32>
    %272 = arith.maximumf %271, %270 : vector<8x128xf32>
    %273 = vector.broadcast %cst_160 : f32 to vector<8x128xf32>
    %274 = arith.minimumf %273, %272 : vector<8x128xf32>
    %275 = vector.broadcast %3 : vector<1x128xf32> to vector<8x128xf32>
    %276 = arith.subf %275, %260 : vector<8x128xf32>
    %cst_161 = arith.constant 6.66666659E-4 : f32
    %277 = vector.broadcast %cst_161 : f32 to vector<8x128xf32>
    %278 = arith.mulf %276, %277 : vector<8x128xf32>
    %279 = arith.addf %260, %278 : vector<8x128xf32>
    %cst_162 = arith.constant 1.000000e+00 : f32
    %280 = vector.broadcast %cst_162 : f32 to vector<8x128xf32>
    %281 = arith.subf %280, %260 : vector<8x128xf32>
    %282 = vector.broadcast %3 : vector<1x128xf32> to vector<8x128xf32>
    %283 = arith.mulf %282, %281 : vector<8x128xf32>
    %284 = arith.mulf %283, %258 : vector<8x128xf32>
    %cst_163 = arith.constant 2.000000e-02 : f32
    %285 = vector.broadcast %cst_163 : f32 to vector<8x128xf32>
    %286 = arith.mulf %285, %284 : vector<8x128xf32>
    %287 = arith.addf %279, %286 : vector<8x128xf32>
    %cst_164 = arith.constant 0.000000e+00 : f32
    %cst_165 = arith.constant 1.000000e+00 : f32
    %288 = vector.broadcast %cst_164 : f32 to vector<8x128xf32>
    %289 = arith.maximumf %288, %287 : vector<8x128xf32>
    %290 = vector.broadcast %cst_165 : f32 to vector<8x128xf32>
    %291 = arith.minimumf %290, %289 : vector<8x128xf32>
    %292 = arith.index_cast %c4_i32 : i32 to index
    %c0_166 = arith.constant 0 : index
    %c0_167 = arith.constant 0 : index
    %293 = vector.load %arg8[%292, %c0_166, %c0_167] : memref<8x8x128xf32, #tpu.memory_space<vmem>>, vector<1x8x128xf32>
    %294 = vector.shape_cast %293 : vector<1x8x128xf32> to vector<8x128xf32>
    %295 = vector.shape_cast %274 : vector<8x128xf32> to vector<1x8x128xf32>
    tpu.vector_store %arg8[%292, %c0_166, %c0_167], %295 {strides = array<i32>} : memref<8x8x128xf32, #tpu.memory_space<vmem>>, vector<1x8x128xf32>,
    %296 = arith.index_cast %c4_i32 : i32 to index
    %c0_168 = arith.constant 0 : index
    %c0_169 = arith.constant 0 : index
    %297 = vector.load %arg9[%296, %c0_168, %c0_169] : memref<8x8x128xf32, #tpu.memory_space<vmem>>, vector<1x8x128xf32>
    %298 = vector.shape_cast %297 : vector<1x8x128xf32> to vector<8x128xf32>
    %299 = vector.shape_cast %291 : vector<8x128xf32> to vector<1x8x128xf32>
    tpu.vector_store %arg9[%296, %c0_168, %c0_169], %299 {strides = array<i32>} : memref<8x8x128xf32, #tpu.memory_space<vmem>>, vector<1x8x128xf32>,
    %c0_170 = arith.constant 0 : index
    %c0_171 = arith.constant 0 : index
    %300 = vector.load %arg12[%c0_170, %c0_171] : memref<8x128xf32, #tpu.memory_space<vmem>>, vector<8x128xf32>
    tpu.vector_store %arg12[%c0_170, %c0_171], %274 {strides = array<i32>} : memref<8x128xf32, #tpu.memory_space<vmem>>, vector<8x128xf32>,
    %c0_172 = arith.constant 0 : index
    %c0_173 = arith.constant 0 : index
    %301 = vector.load %arg13[%c0_172, %c0_173] : memref<8x128xf32, #tpu.memory_space<vmem>>, vector<8x128xf32>
    tpu.vector_store %arg13[%c0_172, %c0_173], %291 {strides = array<i32>} : memref<8x128xf32, #tpu.memory_space<vmem>>, vector<8x128xf32>,
    %302 = arith.mulf %259, %260 : vector<8x128xf32>
    %303 = arith.mulf %258, %302 : vector<8x128xf32>
    %cst_174 = arith.constant dense<0.000000e+00> : vector<8x128xf32>
    %304 = tpu.matmul %303, %4, %cst_174 {dimension_numbers = #tpu.dot_dimension_numbers<[1], [0], [0], [1], [0, 0, 1, 1], [], []>} : vector<8x128xf32>, vector<128x128xf32>, vector<8x128xf32> -> vector<8x128xf32>
    %305 = arith.index_cast %c4_i32 : i32 to index
    %c0_175 = arith.constant 0 : index
    %c0_176 = arith.constant 0 : index
    %306 = vector.load %arg1[%305, %c0_175, %c0_176] : memref<8x8x128xf32, #tpu.memory_space<vmem>>, vector<1x8x128xf32>
    %307 = vector.shape_cast %306 : vector<1x8x128xf32> to vector<8x128xf32>
    %308 = arith.addf %307, %304 : vector<8x128xf32>
    %309 = arith.subf %308, %257 : vector<8x128xf32>
    %cst_177 = arith.constant 1.000000e-01 : f32
    %310 = vector.broadcast %cst_177 : f32 to vector<8x128xf32>
    %311 = arith.mulf %309, %310 : vector<8x128xf32>
    %312 = arith.addf %257, %311 : vector<8x128xf32>
    %313 = arith.index_cast %c4_i32 : i32 to index
    %c0_178 = arith.constant 0 : index
    %c0_179 = arith.constant 0 : index
    %314 = vector.load %arg7[%313, %c0_178, %c0_179] : memref<8x8x128xf32, #tpu.memory_space<vmem>>, vector<1x8x128xf32>
    %315 = vector.shape_cast %314 : vector<1x8x128xf32> to vector<8x128xf32>
    %316 = vector.shape_cast %312 : vector<8x128xf32> to vector<1x8x128xf32>
    tpu.vector_store %arg7[%313, %c0_178, %c0_179], %316 {strides = array<i32>} : memref<8x8x128xf32, #tpu.memory_space<vmem>>, vector<1x8x128xf32>,
    %c0_180 = arith.constant 0 : index
    %c0_181 = arith.constant 0 : index
    %317 = vector.load %arg10[%c0_180, %c0_181] : memref<8x128xf32, #tpu.memory_space<vmem>>, vector<8x128xf32>
    tpu.vector_store %arg10[%c0_180, %c0_181], %312 {strides = array<i32>} : memref<8x128xf32, #tpu.memory_space<vmem>>, vector<8x128xf32>,
    %318 = math.tanh %312 : vector<8x128xf32>
    %c0_182 = arith.constant 0 : index
    %c0_183 = arith.constant 0 : index
    %319 = vector.load %arg11[%c0_182, %c0_183] : memref<8x128xf32, #tpu.memory_space<vmem>>, vector<8x128xf32>
    tpu.vector_store %arg11[%c0_182, %c0_183], %318 {strides = array<i32>} : memref<8x128xf32, #tpu.memory_space<vmem>>, vector<8x128xf32>,
    %c5_i32 = arith.constant 5 : i32
    %c0_184 = arith.constant 0 : index
    %c0_185 = arith.constant 0 : index
    %320 = vector.load %arg10[%c0_184, %c0_185] : memref<8x128xf32, #tpu.memory_space<vmem>>, vector<8x128xf32>
    %c0_186 = arith.constant 0 : index
    %c0_187 = arith.constant 0 : index
    %321 = vector.load %arg11[%c0_186, %c0_187] : memref<8x128xf32, #tpu.memory_space<vmem>>, vector<8x128xf32>
    %c0_188 = arith.constant 0 : index
    %c0_189 = arith.constant 0 : index
    %322 = vector.load %arg12[%c0_188, %c0_189] : memref<8x128xf32, #tpu.memory_space<vmem>>, vector<8x128xf32>
    %c0_190 = arith.constant 0 : index
    %c0_191 = arith.constant 0 : index
    %323 = vector.load %arg13[%c0_190, %c0_191] : memref<8x128xf32, #tpu.memory_space<vmem>>, vector<8x128xf32>
    %cst_192 = arith.constant 1.000000e+00 : f32
    %324 = vector.broadcast %cst_192 : f32 to vector<8x128xf32>
    %325 = arith.subf %324, %322 : vector<8x128xf32>
    %cst_193 = arith.constant 5.000000e-03 : f32
    %326 = vector.broadcast %cst_193 : f32 to vector<8x128xf32>
    %327 = arith.mulf %325, %326 : vector<8x128xf32>
    %328 = arith.addf %322, %327 : vector<8x128xf32>
    %329 = arith.mulf %323, %322 : vector<8x128xf32>
    %330 = arith.mulf %329, %321 : vector<8x128xf32>
    %cst_194 = arith.constant 2.000000e-02 : f32
    %331 = vector.broadcast %cst_194 : f32 to vector<8x128xf32>
    %332 = arith.mulf %331, %330 : vector<8x128xf32>
    %333 = arith.subf %328, %332 : vector<8x128xf32>
    %cst_195 = arith.constant 0.000000e+00 : f32
    %cst_196 = arith.constant 1.000000e+00 : f32
    %334 = vector.broadcast %cst_195 : f32 to vector<8x128xf32>
    %335 = arith.maximumf %334, %333 : vector<8x128xf32>
    %336 = vector.broadcast %cst_196 : f32 to vector<8x128xf32>
    %337 = arith.minimumf %336, %335 : vector<8x128xf32>
    %338 = vector.broadcast %3 : vector<1x128xf32> to vector<8x128xf32>
    %339 = arith.subf %338, %323 : vector<8x128xf32>
    %cst_197 = arith.constant 6.66666659E-4 : f32
    %340 = vector.broadcast %cst_197 : f32 to vector<8x128xf32>
    %341 = arith.mulf %339, %340 : vector<8x128xf32>
    %342 = arith.addf %323, %341 : vector<8x128xf32>
    %cst_198 = arith.constant 1.000000e+00 : f32
    %343 = vector.broadcast %cst_198 : f32 to vector<8x128xf32>
    %344 = arith.subf %343, %323 : vector<8x128xf32>
    %345 = vector.broadcast %3 : vector<1x128xf32> to vector<8x128xf32>
    %346 = arith.mulf %345, %344 : vector<8x128xf32>
    %347 = arith.mulf %346, %321 : vector<8x128xf32>
    %cst_199 = arith.constant 2.000000e-02 : f32
    %348 = vector.broadcast %cst_199 : f32 to vector<8x128xf32>
    %349 = arith.mulf %348, %347 : vector<8x128xf32>
    %350 = arith.addf %342, %349 : vector<8x128xf32>
    %cst_200 = arith.constant 0.000000e+00 : f32
    %cst_201 = arith.constant 1.000000e+00 : f32
    %351 = vector.broadcast %cst_200 : f32 to vector<8x128xf32>
    %352 = arith.maximumf %351, %350 : vector<8x128xf32>
    %353 = vector.broadcast %cst_201 : f32 to vector<8x128xf32>
    %354 = arith.minimumf %353, %352 : vector<8x128xf32>
    %355 = arith.index_cast %c5_i32 : i32 to index
    %c0_202 = arith.constant 0 : index
    %c0_203 = arith.constant 0 : index
    %356 = vector.load %arg8[%355, %c0_202, %c0_203] : memref<8x8x128xf32, #tpu.memory_space<vmem>>, vector<1x8x128xf32>
    %357 = vector.shape_cast %356 : vector<1x8x128xf32> to vector<8x128xf32>
    %358 = vector.shape_cast %337 : vector<8x128xf32> to vector<1x8x128xf32>
    tpu.vector_store %arg8[%355, %c0_202, %c0_203], %358 {strides = array<i32>} : memref<8x8x128xf32, #tpu.memory_space<vmem>>, vector<1x8x128xf32>,
    %359 = arith.index_cast %c5_i32 : i32 to index
    %c0_204 = arith.constant 0 : index
    %c0_205 = arith.constant 0 : index
    %360 = vector.load %arg9[%359, %c0_204, %c0_205] : memref<8x8x128xf32, #tpu.memory_space<vmem>>, vector<1x8x128xf32>
    %361 = vector.shape_cast %360 : vector<1x8x128xf32> to vector<8x128xf32>
    %362 = vector.shape_cast %354 : vector<8x128xf32> to vector<1x8x128xf32>
    tpu.vector_store %arg9[%359, %c0_204, %c0_205], %362 {strides = array<i32>} : memref<8x8x128xf32, #tpu.memory_space<vmem>>, vector<1x8x128xf32>,
    %c0_206 = arith.constant 0 : index
    %c0_207 = arith.constant 0 : index
    %363 = vector.load %arg12[%c0_206, %c0_207] : memref<8x128xf32, #tpu.memory_space<vmem>>, vector<8x128xf32>
    tpu.vector_store %arg12[%c0_206, %c0_207], %337 {strides = array<i32>} : memref<8x128xf32, #tpu.memory_space<vmem>>, vector<8x128xf32>,
    %c0_208 = arith.constant 0 : index
    %c0_209 = arith.constant 0 : index
    %364 = vector.load %arg13[%c0_208, %c0_209] : memref<8x128xf32, #tpu.memory_space<vmem>>, vector<8x128xf32>
    tpu.vector_store %arg13[%c0_208, %c0_209], %354 {strides = array<i32>} : memref<8x128xf32, #tpu.memory_space<vmem>>, vector<8x128xf32>,
    %365 = arith.mulf %322, %323 : vector<8x128xf32>
    %366 = arith.mulf %321, %365 : vector<8x128xf32>
    %cst_210 = arith.constant dense<0.000000e+00> : vector<8x128xf32>
    %367 = tpu.matmul %366, %4, %cst_210 {dimension_numbers = #tpu.dot_dimension_numbers<[1], [0], [0], [1], [0, 0, 1, 1], [], []>} : vector<8x128xf32>, vector<128x128xf32>, vector<8x128xf32> -> vector<8x128xf32>
    %368 = arith.index_cast %c5_i32 : i32 to index
    %c0_211 = arith.constant 0 : index
    %c0_212 = arith.constant 0 : index
    %369 = vector.load %arg1[%368, %c0_211, %c0_212] : memref<8x8x128xf32, #tpu.memory_space<vmem>>, vector<1x8x128xf32>
    %370 = vector.shape_cast %369 : vector<1x8x128xf32> to vector<8x128xf32>
    %371 = arith.addf %370, %367 : vector<8x128xf32>
    %372 = arith.subf %371, %320 : vector<8x128xf32>
    %cst_213 = arith.constant 1.000000e-01 : f32
    %373 = vector.broadcast %cst_213 : f32 to vector<8x128xf32>
    %374 = arith.mulf %372, %373 : vector<8x128xf32>
    %375 = arith.addf %320, %374 : vector<8x128xf32>
    %376 = arith.index_cast %c5_i32 : i32 to index
    %c0_214 = arith.constant 0 : index
    %c0_215 = arith.constant 0 : index
    %377 = vector.load %arg7[%376, %c0_214, %c0_215] : memref<8x8x128xf32, #tpu.memory_space<vmem>>, vector<1x8x128xf32>
    %378 = vector.shape_cast %377 : vector<1x8x128xf32> to vector<8x128xf32>
    %379 = vector.shape_cast %375 : vector<8x128xf32> to vector<1x8x128xf32>
    tpu.vector_store %arg7[%376, %c0_214, %c0_215], %379 {strides = array<i32>} : memref<8x8x128xf32, #tpu.memory_space<vmem>>, vector<1x8x128xf32>,
    %c0_216 = arith.constant 0 : index
    %c0_217 = arith.constant 0 : index
    %380 = vector.load %arg10[%c0_216, %c0_217] : memref<8x128xf32, #tpu.memory_space<vmem>>, vector<8x128xf32>
    tpu.vector_store %arg10[%c0_216, %c0_217], %375 {strides = array<i32>} : memref<8x128xf32, #tpu.memory_space<vmem>>, vector<8x128xf32>,
    %381 = math.tanh %375 : vector<8x128xf32>
    %c0_218 = arith.constant 0 : index
    %c0_219 = arith.constant 0 : index
    %382 = vector.load %arg11[%c0_218, %c0_219] : memref<8x128xf32, #tpu.memory_space<vmem>>, vector<8x128xf32>
    tpu.vector_store %arg11[%c0_218, %c0_219], %381 {strides = array<i32>} : memref<8x128xf32, #tpu.memory_space<vmem>>, vector<8x128xf32>,
    %c6_i32 = arith.constant 6 : i32
    %c0_220 = arith.constant 0 : index
    %c0_221 = arith.constant 0 : index
    %383 = vector.load %arg10[%c0_220, %c0_221] : memref<8x128xf32, #tpu.memory_space<vmem>>, vector<8x128xf32>
    %c0_222 = arith.constant 0 : index
    %c0_223 = arith.constant 0 : index
    %384 = vector.load %arg11[%c0_222, %c0_223] : memref<8x128xf32, #tpu.memory_space<vmem>>, vector<8x128xf32>
    %c0_224 = arith.constant 0 : index
    %c0_225 = arith.constant 0 : index
    %385 = vector.load %arg12[%c0_224, %c0_225] : memref<8x128xf32, #tpu.memory_space<vmem>>, vector<8x128xf32>
    %c0_226 = arith.constant 0 : index
    %c0_227 = arith.constant 0 : index
    %386 = vector.load %arg13[%c0_226, %c0_227] : memref<8x128xf32, #tpu.memory_space<vmem>>, vector<8x128xf32>
    %cst_228 = arith.constant 1.000000e+00 : f32
    %387 = vector.broadcast %cst_228 : f32 to vector<8x128xf32>
    %388 = arith.subf %387, %385 : vector<8x128xf32>
    %cst_229 = arith.constant 5.000000e-03 : f32
    %389 = vector.broadcast %cst_229 : f32 to vector<8x128xf32>
    %390 = arith.mulf %388, %389 : vector<8x128xf32>
    %391 = arith.addf %385, %390 : vector<8x128xf32>
    %392 = arith.mulf %386, %385 : vector<8x128xf32>
    %393 = arith.mulf %392, %384 : vector<8x128xf32>
    %cst_230 = arith.constant 2.000000e-02 : f32
    %394 = vector.broadcast %cst_230 : f32 to vector<8x128xf32>
    %395 = arith.mulf %394, %393 : vector<8x128xf32>
    %396 = arith.subf %391, %395 : vector<8x128xf32>
    %cst_231 = arith.constant 0.000000e+00 : f32
    %cst_232 = arith.constant 1.000000e+00 : f32
    %397 = vector.broadcast %cst_231 : f32 to vector<8x128xf32>
    %398 = arith.maximumf %397, %396 : vector<8x128xf32>
    %399 = vector.broadcast %cst_232 : f32 to vector<8x128xf32>
    %400 = arith.minimumf %399, %398 : vector<8x128xf32>
    %401 = vector.broadcast %3 : vector<1x128xf32> to vector<8x128xf32>
    %402 = arith.subf %401, %386 : vector<8x128xf32>
    %cst_233 = arith.constant 6.66666659E-4 : f32
    %403 = vector.broadcast %cst_233 : f32 to vector<8x128xf32>
    %404 = arith.mulf %402, %403 : vector<8x128xf32>
    %405 = arith.addf %386, %404 : vector<8x128xf32>
    %cst_234 = arith.constant 1.000000e+00 : f32
    %406 = vector.broadcast %cst_234 : f32 to vector<8x128xf32>
    %407 = arith.subf %406, %386 : vector<8x128xf32>
    %408 = vector.broadcast %3 : vector<1x128xf32> to vector<8x128xf32>
    %409 = arith.mulf %408, %407 : vector<8x128xf32>
    %410 = arith.mulf %409, %384 : vector<8x128xf32>
    %cst_235 = arith.constant 2.000000e-02 : f32
    %411 = vector.broadcast %cst_235 : f32 to vector<8x128xf32>
    %412 = arith.mulf %411, %410 : vector<8x128xf32>
    %413 = arith.addf %405, %412 : vector<8x128xf32>
    %cst_236 = arith.constant 0.000000e+00 : f32
    %cst_237 = arith.constant 1.000000e+00 : f32
    %414 = vector.broadcast %cst_236 : f32 to vector<8x128xf32>
    %415 = arith.maximumf %414, %413 : vector<8x128xf32>
    %416 = vector.broadcast %cst_237 : f32 to vector<8x128xf32>
    %417 = arith.minimumf %416, %415 : vector<8x128xf32>
    %418 = arith.index_cast %c6_i32 : i32 to index
    %c0_238 = arith.constant 0 : index
    %c0_239 = arith.constant 0 : index
    %419 = vector.load %arg8[%418, %c0_238, %c0_239] : memref<8x8x128xf32, #tpu.memory_space<vmem>>, vector<1x8x128xf32>
    %420 = vector.shape_cast %419 : vector<1x8x128xf32> to vector<8x128xf32>
    %421 = vector.shape_cast %400 : vector<8x128xf32> to vector<1x8x128xf32>
    tpu.vector_store %arg8[%418, %c0_238, %c0_239], %421 {strides = array<i32>} : memref<8x8x128xf32, #tpu.memory_space<vmem>>, vector<1x8x128xf32>,
    %422 = arith.index_cast %c6_i32 : i32 to index
    %c0_240 = arith.constant 0 : index
    %c0_241 = arith.constant 0 : index
    %423 = vector.load %arg9[%422, %c0_240, %c0_241] : memref<8x8x128xf32, #tpu.memory_space<vmem>>, vector<1x8x128xf32>
    %424 = vector.shape_cast %423 : vector<1x8x128xf32> to vector<8x128xf32>
    %425 = vector.shape_cast %417 : vector<8x128xf32> to vector<1x8x128xf32>
    tpu.vector_store %arg9[%422, %c0_240, %c0_241], %425 {strides = array<i32>} : memref<8x8x128xf32, #tpu.memory_space<vmem>>, vector<1x8x128xf32>,
    %c0_242 = arith.constant 0 : index
    %c0_243 = arith.constant 0 : index
    %426 = vector.load %arg12[%c0_242, %c0_243] : memref<8x128xf32, #tpu.memory_space<vmem>>, vector<8x128xf32>
    tpu.vector_store %arg12[%c0_242, %c0_243], %400 {strides = array<i32>} : memref<8x128xf32, #tpu.memory_space<vmem>>, vector<8x128xf32>,
    %c0_244 = arith.constant 0 : index
    %c0_245 = arith.constant 0 : index
    %427 = vector.load %arg13[%c0_244, %c0_245] : memref<8x128xf32, #tpu.memory_space<vmem>>, vector<8x128xf32>
    tpu.vector_store %arg13[%c0_244, %c0_245], %417 {strides = array<i32>} : memref<8x128xf32, #tpu.memory_space<vmem>>, vector<8x128xf32>,
    %428 = arith.mulf %385, %386 : vector<8x128xf32>
    %429 = arith.mulf %384, %428 : vector<8x128xf32>
    %cst_246 = arith.constant dense<0.000000e+00> : vector<8x128xf32>
    %430 = tpu.matmul %429, %4, %cst_246 {dimension_numbers = #tpu.dot_dimension_numbers<[1], [0], [0], [1], [0, 0, 1, 1], [], []>} : vector<8x128xf32>, vector<128x128xf32>, vector<8x128xf32> -> vector<8x128xf32>
    %431 = arith.index_cast %c6_i32 : i32 to index
    %c0_247 = arith.constant 0 : index
    %c0_248 = arith.constant 0 : index
    %432 = vector.load %arg1[%431, %c0_247, %c0_248] : memref<8x8x128xf32, #tpu.memory_space<vmem>>, vector<1x8x128xf32>
    %433 = vector.shape_cast %432 : vector<1x8x128xf32> to vector<8x128xf32>
    %434 = arith.addf %433, %430 : vector<8x128xf32>
    %435 = arith.subf %434, %383 : vector<8x128xf32>
    %cst_249 = arith.constant 1.000000e-01 : f32
    %436 = vector.broadcast %cst_249 : f32 to vector<8x128xf32>
    %437 = arith.mulf %435, %436 : vector<8x128xf32>
    %438 = arith.addf %383, %437 : vector<8x128xf32>
    %439 = arith.index_cast %c6_i32 : i32 to index
    %c0_250 = arith.constant 0 : index
    %c0_251 = arith.constant 0 : index
    %440 = vector.load %arg7[%439, %c0_250, %c0_251] : memref<8x8x128xf32, #tpu.memory_space<vmem>>, vector<1x8x128xf32>
    %441 = vector.shape_cast %440 : vector<1x8x128xf32> to vector<8x128xf32>
    %442 = vector.shape_cast %438 : vector<8x128xf32> to vector<1x8x128xf32>
    tpu.vector_store %arg7[%439, %c0_250, %c0_251], %442 {strides = array<i32>} : memref<8x8x128xf32, #tpu.memory_space<vmem>>, vector<1x8x128xf32>,
    %c0_252 = arith.constant 0 : index
    %c0_253 = arith.constant 0 : index
    %443 = vector.load %arg10[%c0_252, %c0_253] : memref<8x128xf32, #tpu.memory_space<vmem>>, vector<8x128xf32>
    tpu.vector_store %arg10[%c0_252, %c0_253], %438 {strides = array<i32>} : memref<8x128xf32, #tpu.memory_space<vmem>>, vector<8x128xf32>,
    %444 = math.tanh %438 : vector<8x128xf32>
    %c0_254 = arith.constant 0 : index
    %c0_255 = arith.constant 0 : index
    %445 = vector.load %arg11[%c0_254, %c0_255] : memref<8x128xf32, #tpu.memory_space<vmem>>, vector<8x128xf32>
    tpu.vector_store %arg11[%c0_254, %c0_255], %444 {strides = array<i32>} : memref<8x128xf32, #tpu.memory_space<vmem>>, vector<8x128xf32>,
    %c7_i32 = arith.constant 7 : i32
    %c0_256 = arith.constant 0 : index
    %c0_257 = arith.constant 0 : index
    %446 = vector.load %arg10[%c0_256, %c0_257] : memref<8x128xf32, #tpu.memory_space<vmem>>, vector<8x128xf32>
    %c0_258 = arith.constant 0 : index
    %c0_259 = arith.constant 0 : index
    %447 = vector.load %arg11[%c0_258, %c0_259] : memref<8x128xf32, #tpu.memory_space<vmem>>, vector<8x128xf32>
    %c0_260 = arith.constant 0 : index
    %c0_261 = arith.constant 0 : index
    %448 = vector.load %arg12[%c0_260, %c0_261] : memref<8x128xf32, #tpu.memory_space<vmem>>, vector<8x128xf32>
    %c0_262 = arith.constant 0 : index
    %c0_263 = arith.constant 0 : index
    %449 = vector.load %arg13[%c0_262, %c0_263] : memref<8x128xf32, #tpu.memory_space<vmem>>, vector<8x128xf32>
    %cst_264 = arith.constant 1.000000e+00 : f32
    %450 = vector.broadcast %cst_264 : f32 to vector<8x128xf32>
    %451 = arith.subf %450, %448 : vector<8x128xf32>
    %cst_265 = arith.constant 5.000000e-03 : f32
    %452 = vector.broadcast %cst_265 : f32 to vector<8x128xf32>
    %453 = arith.mulf %451, %452 : vector<8x128xf32>
    %454 = arith.addf %448, %453 : vector<8x128xf32>
    %455 = arith.mulf %449, %448 : vector<8x128xf32>
    %456 = arith.mulf %455, %447 : vector<8x128xf32>
    %cst_266 = arith.constant 2.000000e-02 : f32
    %457 = vector.broadcast %cst_266 : f32 to vector<8x128xf32>
    %458 = arith.mulf %457, %456 : vector<8x128xf32>
    %459 = arith.subf %454, %458 : vector<8x128xf32>
    %cst_267 = arith.constant 0.000000e+00 : f32
    %cst_268 = arith.constant 1.000000e+00 : f32
    %460 = vector.broadcast %cst_267 : f32 to vector<8x128xf32>
    %461 = arith.maximumf %460, %459 : vector<8x128xf32>
    %462 = vector.broadcast %cst_268 : f32 to vector<8x128xf32>
    %463 = arith.minimumf %462, %461 : vector<8x128xf32>
    %464 = vector.broadcast %3 : vector<1x128xf32> to vector<8x128xf32>
    %465 = arith.subf %464, %449 : vector<8x128xf32>
    %cst_269 = arith.constant 6.66666659E-4 : f32
    %466 = vector.broadcast %cst_269 : f32 to vector<8x128xf32>
    %467 = arith.mulf %465, %466 : vector<8x128xf32>
    %468 = arith.addf %449, %467 : vector<8x128xf32>
    %cst_270 = arith.constant 1.000000e+00 : f32
    %469 = vector.broadcast %cst_270 : f32 to vector<8x128xf32>
    %470 = arith.subf %469, %449 : vector<8x128xf32>
    %471 = vector.broadcast %3 : vector<1x128xf32> to vector<8x128xf32>
    %472 = arith.mulf %471, %470 : vector<8x128xf32>
    %473 = arith.mulf %472, %447 : vector<8x128xf32>
    %cst_271 = arith.constant 2.000000e-02 : f32
    %474 = vector.broadcast %cst_271 : f32 to vector<8x128xf32>
    %475 = arith.mulf %474, %473 : vector<8x128xf32>
    %476 = arith.addf %468, %475 : vector<8x128xf32>
    %cst_272 = arith.constant 0.000000e+00 : f32
    %cst_273 = arith.constant 1.000000e+00 : f32
    %477 = vector.broadcast %cst_272 : f32 to vector<8x128xf32>
    %478 = arith.maximumf %477, %476 : vector<8x128xf32>
    %479 = vector.broadcast %cst_273 : f32 to vector<8x128xf32>
    %480 = arith.minimumf %479, %478 : vector<8x128xf32>
    %481 = arith.index_cast %c7_i32 : i32 to index
    %c0_274 = arith.constant 0 : index
    %c0_275 = arith.constant 0 : index
    %482 = vector.load %arg8[%481, %c0_274, %c0_275] : memref<8x8x128xf32, #tpu.memory_space<vmem>>, vector<1x8x128xf32>
    %483 = vector.shape_cast %482 : vector<1x8x128xf32> to vector<8x128xf32>
    %484 = vector.shape_cast %463 : vector<8x128xf32> to vector<1x8x128xf32>
    tpu.vector_store %arg8[%481, %c0_274, %c0_275], %484 {strides = array<i32>} : memref<8x8x128xf32, #tpu.memory_space<vmem>>, vector<1x8x128xf32>,
    %485 = arith.index_cast %c7_i32 : i32 to index
    %c0_276 = arith.constant 0 : index
    %c0_277 = arith.constant 0 : index
    %486 = vector.load %arg9[%485, %c0_276, %c0_277] : memref<8x8x128xf32, #tpu.memory_space<vmem>>, vector<1x8x128xf32>
    %487 = vector.shape_cast %486 : vector<1x8x128xf32> to vector<8x128xf32>
    %488 = vector.shape_cast %480 : vector<8x128xf32> to vector<1x8x128xf32>
    tpu.vector_store %arg9[%485, %c0_276, %c0_277], %488 {strides = array<i32>} : memref<8x8x128xf32, #tpu.memory_space<vmem>>, vector<1x8x128xf32>,
    %c0_278 = arith.constant 0 : index
    %c0_279 = arith.constant 0 : index
    %489 = vector.load %arg12[%c0_278, %c0_279] : memref<8x128xf32, #tpu.memory_space<vmem>>, vector<8x128xf32>
    tpu.vector_store %arg12[%c0_278, %c0_279], %463 {strides = array<i32>} : memref<8x128xf32, #tpu.memory_space<vmem>>, vector<8x128xf32>,
    %c0_280 = arith.constant 0 : index
    %c0_281 = arith.constant 0 : index
    %490 = vector.load %arg13[%c0_280, %c0_281] : memref<8x128xf32, #tpu.memory_space<vmem>>, vector<8x128xf32>
    tpu.vector_store %arg13[%c0_280, %c0_281], %480 {strides = array<i32>} : memref<8x128xf32, #tpu.memory_space<vmem>>, vector<8x128xf32>,
    %491 = arith.mulf %448, %449 : vector<8x128xf32>
    %492 = arith.mulf %447, %491 : vector<8x128xf32>
    %cst_282 = arith.constant dense<0.000000e+00> : vector<8x128xf32>
    %493 = tpu.matmul %492, %4, %cst_282 {dimension_numbers = #tpu.dot_dimension_numbers<[1], [0], [0], [1], [0, 0, 1, 1], [], []>} : vector<8x128xf32>, vector<128x128xf32>, vector<8x128xf32> -> vector<8x128xf32>
    %494 = arith.index_cast %c7_i32 : i32 to index
    %c0_283 = arith.constant 0 : index
    %c0_284 = arith.constant 0 : index
    %495 = vector.load %arg1[%494, %c0_283, %c0_284] : memref<8x8x128xf32, #tpu.memory_space<vmem>>, vector<1x8x128xf32>
    %496 = vector.shape_cast %495 : vector<1x8x128xf32> to vector<8x128xf32>
    %497 = arith.addf %496, %493 : vector<8x128xf32>
    %498 = arith.subf %497, %446 : vector<8x128xf32>
    %cst_285 = arith.constant 1.000000e-01 : f32
    %499 = vector.broadcast %cst_285 : f32 to vector<8x128xf32>
    %500 = arith.mulf %498, %499 : vector<8x128xf32>
    %501 = arith.addf %446, %500 : vector<8x128xf32>
    %502 = arith.index_cast %c7_i32 : i32 to index
    %c0_286 = arith.constant 0 : index
    %c0_287 = arith.constant 0 : index
    %503 = vector.load %arg7[%502, %c0_286, %c0_287] : memref<8x8x128xf32, #tpu.memory_space<vmem>>, vector<1x8x128xf32>
    %504 = vector.shape_cast %503 : vector<1x8x128xf32> to vector<8x128xf32>
    %505 = vector.shape_cast %501 : vector<8x128xf32> to vector<1x8x128xf32>
    tpu.vector_store %arg7[%502, %c0_286, %c0_287], %505 {strides = array<i32>} : memref<8x8x128xf32, #tpu.memory_space<vmem>>, vector<1x8x128xf32>,
    %c0_288 = arith.constant 0 : index
    %c0_289 = arith.constant 0 : index
    %506 = vector.load %arg10[%c0_288, %c0_289] : memref<8x128xf32, #tpu.memory_space<vmem>>, vector<8x128xf32>
    tpu.vector_store %arg10[%c0_288, %c0_289], %501 {strides = array<i32>} : memref<8x128xf32, #tpu.memory_space<vmem>>, vector<8x128xf32>,
    %507 = math.tanh %501 : vector<8x128xf32>
    %c0_290 = arith.constant 0 : index
    %c0_291 = arith.constant 0 : index
    %508 = vector.load %arg11[%c0_290, %c0_291] : memref<8x128xf32, #tpu.memory_space<vmem>>, vector<8x128xf32>
    tpu.vector_store %arg11[%c0_290, %c0_291], %507 {strides = array<i32>} : memref<8x128xf32, #tpu.memory_space<vmem>>, vector<8x128xf32>,
    %c8_i32 = arith.constant 8 : i32
    return
  }
  func.func @transform_0(%arg0: i32) -> (i32, i32, i32) {
    %c0_i32 = arith.constant 0 : i32
    %c0_i32_0 = arith.constant 0 : i32
    %c0_i32_1 = arith.constant 0 : i32
    return %arg0, %c0_i32, %c0_i32_0 : i32, i32, i32
  }
  func.func @transform_1(%arg0: i32) -> (i32, i32) {
    %c0_i32 = arith.constant 0 : i32
    %c0_i32_0 = arith.constant 0 : i32
    %c0_i32_1 = arith.constant 0 : i32
    return %c0_i32, %c0_i32_0 : i32, i32
  }
  func.func @transform_2(%arg0: i32) -> (i32, i32) {
    %c0_i32 = arith.constant 0 : i32
    %c0_i32_0 = arith.constant 0 : i32
    %c0_i32_1 = arith.constant 0 : i32
    return %c0_i32, %c0_i32_0 : i32, i32
  }
  func.func @transform_3(%arg0: i32) -> (i32, i32) {
    %c0_i32 = arith.constant 0 : i32
    %c0_i32_0 = arith.constant 0 : i32
    %c0_i32_1 = arith.constant 0 : i32
    return %c0_i32, %c0_i32_0 : i32, i32
  }
  func.func @transform_4(%arg0: i32) -> (i32, i32) {
    %c0_i32 = arith.constant 0 : i32
    %c0_i32_0 = arith.constant 0 : i32
    %c0_i32_1 = arith.constant 0 : i32
    return %c0_i32, %c0_i32_0 : i32, i32
  }
  func.func @transform_5(%arg0: i32) -> (i32, i32) {
    %c0_i32 = arith.constant 0 : i32
    %c0_i32_0 = arith.constant 0 : i32
    %c0_i32_1 = arith.constant 0 : i32
    return %c0_i32, %c0_i32_0 : i32, i32
  }
  func.func @transform_6(%arg0: i32) -> (i32, i32, i32) {
    %c0_i32 = arith.constant 0 : i32
    %c0_i32_0 = arith.constant 0 : i32
    %c0_i32_1 = arith.constant 0 : i32
    return %arg0, %c0_i32, %c0_i32_0 : i32, i32, i32
  }
  func.func @transform_7(%arg0: i32) -> (i32, i32, i32) {
    %c0_i32 = arith.constant 0 : i32
    %c0_i32_0 = arith.constant 0 : i32
    %c0_i32_1 = arith.constant 0 : i32
    return %arg0, %c0_i32, %c0_i32_0 : i32, i32, i32
  }
  func.func @transform_8(%arg0: i32) -> (i32, i32, i32) {
    %c0_i32 = arith.constant 0 : i32
    %c0_i32_0 = arith.constant 0 : i32
    %c0_i32_1 = arith.constant 0 : i32
    return %arg0, %c0_i32, %c0_i32_0 : i32, i32, i32
  }
}

</mosaic_0001>

<llo_original>
// kernel: tpu_custom_call.1
$region0: #{tpu_custom_call.1}
  #allocation0 [shape = 'u32[]', space=smem, size = 0x4, offset = 0x4, fixed_abs, tag = 'smem constant byte address 0x4 - core index']
  #allocation1 [shape = 'u32[144,128]{1,0:T(1,128)}', space=vmem, size = 0x12000, scoped, tag = 'internal scratch']
  #allocation2 [shape = 'f32[8,128]{1,0:T(8,128)}', space=vmem, size = 0x1000, scoped, tag = 'scratch operand']
  #allocation3 [shape = 'f32[8,128]{1,0:T(8,128)}', space=vmem, size = 0x1000, scoped, tag = 'scratch operand']
  #allocation4 [shape = 'f32[8,128]{1,0:T(8,128)}', space=vmem, size = 0x1000, scoped, tag = 'scratch operand']
  #allocation5 [shape = 'f32[8,128]{1,0:T(8,128)}', space=vmem, size = 0x1000, scoped, tag = 'scratch operand']
  %s0 = inlined_call_operand.hbm [shape: f32[8,8,128], index: 0, kind: input, shape index: {}]
  %s1 = inlined_call_operand.hbm [shape: f32[8,128], index: 1, kind: input, shape index: {}]
  %s2 = inlined_call_operand.hbm [shape: f32[8,128], index: 2, kind: input, shape index: {}]
  %s3 = inlined_call_operand.vmem [shape: f32[8,128], index: 3, kind: input, shape index: {}]
  %s4 = inlined_call_operand.vmem [shape: f32[1,128], index: 4, kind: input, shape index: {}]
  %s5 = inlined_call_operand.hbm [shape: f32[128,128], index: 5, kind: input, shape index: {}]
  %s6 = inlined_call_operand.hbm [shape: f32[8,8,128], index: 6, kind: output, shape index: {0}]
  %s7 = inlined_call_operand.hbm [shape: f32[8,8,128], index: 7, kind: output, shape index: {1}]
  %s8 = inlined_call_operand.hbm [shape: f32[8,8,128], index: 8, kind: output, shape index: {2}]
  %9 = xla_tuple %s6, %s7, %s8
  %s10 = sld [smem:[#allocation0]]
  $region70: #{tpu_custom_call.1} parent=0
    _
  %s12 = ssub.s32 1, %s10
  %s13 = scalar_select 0, %s12, %s10
  $region1: #{tpu_custom_call.1} parent=0
    #allocation6 [shape = 'u8[32768]{0}', space=vmem, size = 0x8000, scoped, tag = 'input window, operand 0, single buffered']
    #allocation7 [shape = 's32[1]{0}', space=sflag, size = 0x4, scoped, tag = 'scoped memory for tpu_custom_call.1']
    #allocation8 [shape = 's32[1]{0}', space=sflag, size = 0x4, scoped, tag = 'scoped memory for tpu_custom_call.1']
    #allocation9 [shape = 'u8[4096]{0}', space=vmem, size = 0x1000, scoped, tag = 'input window, operand 1, single buffered']
    #allocation10 [shape = 's32[1]{0}', space=sflag, size = 0x4, scoped, tag = 'scoped memory for tpu_custom_call.1']
    #allocation11 [shape = 'u8[4096]{0}', space=vmem, size = 0x1000, scoped, tag = 'input window, operand 2, single buffered']
    #allocation12 [shape = 'u8[65536]{0}', space=vmem, size = 0x10000, scoped, tag = 'input window, operand 5, single buffered']
    #allocation13 [shape = 's32[1]{0}', space=sflag, size = 0x4, scoped, tag = 'scoped memory for tpu_custom_call.1']
    #allocation14 [shape = 'u8[32768]{0}', space=vmem, size = 0x8000, scoped, tag = 'output window, operand 0, single buffered']
    #allocation15 [shape = 'u8[32768]{0}', space=vmem, size = 0x8000, scoped, tag = 'output window, operand 1, single buffered']
    #allocation16 [shape = 's32[1]{0}', space=sflag, size = 0x4, scoped, tag = 'scoped memory for tpu_custom_call.1']
    #allocation17 [shape = 'u8[32768]{0}', space=vmem, size = 0x8000, scoped, tag = 'output window, operand 2, single buffered']
    %14 = vsyncpa [#allocation7], 0
    %15 = vsyncpa [#allocation10], 0
    %16 = vsyncpa [#allocation13], 0
    %17 = vsyncpa [#allocation8], 0
    %18 = vsyncpa [#allocation16], 0
    // Predicated region
    $region2: #{tpu_custom_call.1} parent=1 // pred_check
      _
    $region3: #{tpu_custom_call.1} parent=1 // pred_check_branch
      %20 = sbr.rel (0) target = $region5
    $region4: #{tpu_custom_call.1} parent=1 // pred_region
      %s22 = ssub.s32 1024, 1024
      %23 = vsyncadd [#allocation7], %s22
      %s24 = sshll.u32 [#allocation6], 4
      %s25 = int_to_ptr.vmem [resolvable:$true] %s24
      %30 = dma.hbm_to_vmem [thread:$0]  %s0, 1024, %s25, [#allocation7], 128, 128, 8
    $region5: #{tpu_custom_call.1} parent=1 // pred_fallthru
      _
    // Predicated region
    $region6: #{tpu_custom_call.1} parent=1 // pred_check
      _
    $region7: #{tpu_custom_call.1} parent=1 // pred_check_branch
      %32 = sbr.rel (0) target = $region9
    $region8: #{tpu_custom_call.1} parent=1 // pred_region
      %s34 = ssub.s32 128, 128
      %35 = vsyncadd [#allocation10], %s34
      %s37 = sshll.u32 [#allocation9], 4
      %s38 = int_to_ptr.vmem [resolvable:$true] %s37
      %40 = dma.hbm_to_vmem [thread:$0]  %s1, 128, %s38, [#allocation10]
    $region9: #{tpu_custom_call.1} parent=1 // pred_fallthru
      _
    // Predicated region
    $region10: #{tpu_custom_call.1} parent=1 // pred_check
      _
    $region11: #{tpu_custom_call.1} parent=1 // pred_check_branch
      %42 = sbr.rel (0) target = $region13
    $region12: #{tpu_custom_call.1} parent=1 // pred_region
      %s44 = ssub.s32 128, 128
      %45 = vsyncadd [#allocation10], %s44
      %s47 = sshll.u32 [#allocation11], 4
      %s48 = int_to_ptr.vmem [resolvable:$true] %s47
      %50 = dma.hbm_to_vmem [thread:$0]  %s2, 128, %s48, [#allocation10]
    $region13: #{tpu_custom_call.1} parent=1 // pred_fallthru
      _
    // Predicated region
    $region14: #{tpu_custom_call.1} parent=1 // pred_check
      _
    $region15: #{tpu_custom_call.1} parent=1 // pred_check_branch
      %52 = sbr.rel (0) target = $region17
    $region16: #{tpu_custom_call.1} parent=1 // pred_region
      _
    $region17: #{tpu_custom_call.1} parent=1 // pred_fallthru
      _
    // Predicated region
    $region18: #{tpu_custom_call.1} parent=1 // pred_check
      _
    $region19: #{tpu_custom_call.1} parent=1 // pred_check_branch
      %54 = sbr.rel (0) target = $region21
    $region20: #{tpu_custom_call.1} parent=1 // pred_region
      _
    $region21: #{tpu_custom_call.1} parent=1 // pred_fallthru
      _
    // Predicated region
    $region22: #{tpu_custom_call.1} parent=1 // pred_check
      _
    $region23: #{tpu_custom_call.1} parent=1 // pred_check_branch
      %56 = sbr.rel (0) target = $region25
    $region24: #{tpu_custom_call.1} parent=1 // pred_region
      %s58 = ssub.s32 2048, 2048
      %59 = vsyncadd [#allocation13], %s58
      %s60 = sshll.u32 [#allocation12], 4
      %s61 = int_to_ptr.vmem [resolvable:$true] %s60
      %66 = dma.hbm_to_vmem [thread:$0]  %s5, 2048, %s61, [#allocation13], 128, 128, 8
    $region25: #{tpu_custom_call.1} parent=1 // pred_fallthru
      _
    // Predicated region
    $region26: #{tpu_custom_call.1} parent=1 // pred_check
      _
    $region27: #{tpu_custom_call.1} parent=1 // pred_check_branch
      %68 = sbr.rel (0) target = $region29
    $region28: #{tpu_custom_call.1} parent=1 // pred_region
      %69 = dma.done [#allocation7], 1024
    $region29: #{tpu_custom_call.1} parent=1 // pred_fallthru
      _
    // Predicated region
    $region30: #{tpu_custom_call.1} parent=1 // pred_check
      _
    $region31: #{tpu_custom_call.1} parent=1 // pred_check_branch
      %71 = sbr.rel (0) target = $region33
    $region32: #{tpu_custom_call.1} parent=1 // pred_region
      %72 = dma.done [#allocation10], 128
    $region33: #{tpu_custom_call.1} parent=1 // pred_fallthru
      _
    // Predicated region
    $region34: #{tpu_custom_call.1} parent=1 // pred_check
      _
    $region35: #{tpu_custom_call.1} parent=1 // pred_check_branch
      %74 = sbr.rel (0) target = $region37
    $region36: #{tpu_custom_call.1} parent=1 // pred_region
      %75 = dma.done [#allocation10], 128
    $region37: #{tpu_custom_call.1} parent=1 // pred_fallthru
      _
    // Predicated region
    $region38: #{tpu_custom_call.1} parent=1 // pred_check
      _
    $region39: #{tpu_custom_call.1} parent=1 // pred_check_branch
      %77 = sbr.rel (0) target = $region41
    $region40: #{tpu_custom_call.1} parent=1 // pred_region
      %78 = dma.done [#allocation13], 2048
    $region41: #{tpu_custom_call.1} parent=1 // pred_fallthru
      _
    %p79 = scmp.eq.s32.totalorder 0, 0
    // Predicated region
    $region42: #{tpu_custom_call.1} parent=1 // pred_check
      %p80 = pneg %p79
    $region43: #{tpu_custom_call.1} parent=1 // pred_check_branch
      %82 = sbr.rel (%p80) target = $region45
    $region44: #{tpu_custom_call.1} parent=1 // pred_region
      %v83 = vld [vmem:[#allocation9] sm:$0xff]
      %84 = vst [vmem:[#allocation2] sm:$0xff] %v83
      %v85 = vtanh.pop %v83
      %86 = vst [vmem:[#allocation3] sm:$0xff] %v85
      %v87 = vld [vmem:[#allocation11] sm:$0xff]
      %88 = vst [vmem:[#allocation4] sm:$0xff] %v87
      %v89 = vld [vmem:[%s3] sm:$0xff]
      %90 = vst [vmem:[#allocation5] sm:$0xff] %v89
    $region45: #{tpu_custom_call.1} parent=1 // pred_fallthru
      _
    %v91 = vld [vmem:[%s4] sm:$0x1]
    %v92 = vld [vmem:[#allocation12] sm:$0xff]
    %v93 = vld [vmem:[#allocation12 + $0x8] sm:$0xff]
    %v94 = vld [vmem:[#allocation12 + $0x10] sm:$0xff]
    %v95 = vld [vmem:[#allocation12 + $0x18] sm:$0xff]
    %v96 = vld [vmem:[#allocation12 + $0x20] sm:$0xff]
    %v97 = vld [vmem:[#allocation12 + $0x28] sm:$0xff]
    %v98 = vld [vmem:[#allocation12 + $0x30] sm:$0xff]
    %v99 = vld [vmem:[#allocation12 + $0x38] sm:$0xff]
    %v100 = vld [vmem:[#allocation12 + $0x40] sm:$0xff]
    %v101 = vld [vmem:[#allocation12 + $0x48] sm:$0xff]
    %v102 = vld [vmem:[#allocation12 + $0x50] sm:$0xff]
    %v103 = vld [vmem:[#allocation12 + $0x58] sm:$0xff]
    %v104 = vld [vmem:[#allocation12 + $0x60] sm:$0xff]
    %v105 = vld [vmem:[#allocation12 + $0x68] sm:$0xff]
    %v106 = vld [vmem:[#allocation12 + $0x70] sm:$0xff]
    %v107 = vld [vmem:[#allocation12 + $0x78] sm:$0xff]
    %v108 = vld [vmem:[#allocation2] sm:$0xff]
    %v109 = vld [vmem:[#allocation3] sm:$0xff]
    %v110 = vld [vmem:[#allocation4] sm:$0xff]
    %v111 = vld [vmem:[#allocation5] sm:$0xff]
    %v112 = vsub.f32 1.0, %v110
    %v113 = vmul.f32 %v112, 0.005
    %v114 = vadd.f32 %v110, %v113
    %v115 = vmul.f32 %v111, %v110
    %v116 = vmul.f32 %v115, %v109
    %v117 = vmul.f32 %v116, 0.02
    %v118 = vsub.f32 %v114, %v117
    %v119 = vmax.f32 %v118, 0.0
    %v120 = vmin.f32 %v119, 1.0
    %v122 = vlaneseq
    %v123 = vshrl.u32 %v122, 7
    %v124 = vsub.s32 0, %v123
    %v125 = vrot.slane %v91, %v124
    %v127 = vsub.f32 %v125, %v111
    %v128 = vmul.f32 %v127, 0.00066666666
    %v129 = vadd.f32 %v111, %v128
    %v130 = vsub.f32 1.0, %v111
    %v131 = vmul.f32 %v125, %v130
    %v132 = vmul.f32 %v131, %v109
    %v133 = vmul.f32 %v132, 0.02
    %v134 = vadd.f32 %v129, %v133
    %v135 = vmax.f32 %v134, 0.0
    %v136 = vmin.f32 %v135, 1.0
    %137 = vst [vmem:[#allocation15] sm:$0xff] %v120
    %138 = vst [vmem:[#allocation17] sm:$0xff] %v136
    %139 = vst [vmem:[#allocation4] sm:$0xff] %v120
    %140 = vst [vmem:[#allocation5] sm:$0xff] %v136
    %141 = vmatprep.subr.mxu0 0.0
    %142 = vmatpush1.msra.mxu0 %v92
    %143 = vmatprep.subr.mxu0 0.0
    %144 = vmatpush1.msra.mxu0 %v93
    %145 = vmatprep.subr.mxu0 0.0
    %146 = vmatpush1.msra.mxu0 %v94
    %147 = vmatprep.subr.mxu0 0.0
    %148 = vmatpush1.msra.mxu0 %v95
    %149 = vmatprep.subr.mxu0 0.0
    %150 = vmatpush1.msra.mxu0 %v96
    %151 = vmatprep.subr.mxu0 0.0
    %152 = vmatpush1.msra.mxu0 %v97
    %153 = vmatprep.subr.mxu0 0.0
    %154 = vmatpush1.msra.mxu0 %v98
    %155 = vmatprep.subr.mxu0 0.0
    %156 = vmatpush1.msra.mxu0 %v99
    %157 = vmatprep.subr.mxu0 0.0
    %158 = vmatpush1.msra.mxu0 %v100
    %159 = vmatprep.subr.mxu0 0.0
    %160 = vmatpush1.msra.mxu0 %v101
    %161 = vmatprep.subr.mxu0 0.0
    %162 = vmatpush1.msra.mxu0 %v102
    %163 = vmatprep.subr.mxu0 0.0
    %164 = vmatpush1.msra.mxu0 %v103
    %165 = vmatprep.subr.mxu0 0.0
    %166 = vmatpush1.msra.mxu0 %v104
    %167 = vmatprep.subr.mxu0 0.0
    %168 = vmatpush1.msra.mxu0 %v105
    %169 = vmatprep.subr.mxu0 0.0
    %170 = vmatpush1.msra.mxu0 %v106
    %171 = vmatprep.subr.mxu0 0.0
    %172 = vmatpush1.msra.mxu0 %v107
    %173 = vmatprep.subr.mxu0 0.0
    %174 = vmatpush1.msra.mxu0 0.0
    %175 = vmatprep.subr.mxu0 0.0
    %176 = vmatpush1.msra.mxu0 0.0
    %177 = vmatprep.subr.mxu0 0.0
    %178 = vmatpush1.msra.mxu0 0.0
    %179 = vmatprep.subr.mxu0 0.0
    %180 = vmatpush1.msra.mxu0 0.0
    %181 = vmatprep.subr.mxu0 0.0
    %182 = vmatpush1.msra.mxu0 0.0
    %183 = vmatprep.subr.mxu0 0.0
    %184 = vmatpush1.msra.mxu0 0.0
    %185 = vmatprep.subr.mxu0 0.0
    %186 = vmatpush1.msra.mxu0 0.0
    %187 = vmatprep.subr.mxu0 0.0
    %188 = vmatpush1.msra.mxu0 0.0
    %189 = vmatprep.subr.mxu0 0.0
    %190 = vmatpush1.msra.mxu0 0.0
    %191 = vmatprep.subr.mxu0 0.0
    %192 = vmatpush1.msra.mxu0 0.0
    %193 = vmatprep.subr.mxu0 0.0
    %194 = vmatpush1.msra.mxu0 0.0
    %195 = vmatprep.subr.mxu0 0.0
    %196 = vmatpush1.msra.mxu0 0.0
    %197 = vmatprep.subr.mxu0 0.0
    %198 = vmatpush1.msra.mxu0 0.0
    %199 = vmatprep.subr.mxu0 0.0
    %200 = vmatpush1.msra.mxu0 0.0
    %201 = vmatprep.subr.mxu0 0.0
    %202 = vmatpush1.msra.mxu0 0.0
    %203 = vmatprep.subr.mxu0 0.0
    %204 = vmatpush1.msra.mxu0 0.0
    %205 = vmatprep.mubr.f32.mxu0 0.0
    %206 = vmatmul.mubr.f32.gmra.mrb[0].mxu0 %v116
    %v207 = vpop.f32.mrb[0].mxu0
    %v208 = vadd.f32 0.0, %v207
    %v209 = vpop.f32.mrb[0].mxu0
    %210 = vdwg.mxu0
    %v211 = vld [vmem:[#allocation6] sm:$0xff]
    %v212 = vadd.f32 %v211, %v208
    %v213 = vsub.f32 %v212, %v108
    %v214 = vmul.f32 %v213, 0.1
    %v215 = vadd.f32 %v108, %v214
    %216 = vst [vmem:[#allocation14] sm:$0xff] %v215
    %217 = vst [vmem:[#allocation2] sm:$0xff] %v215
    %v218 = vtanh.pop %v215
    %219 = vst [vmem:[#allocation3] sm:$0xff] %v218
    %v220 = vld [vmem:[#allocation2] sm:$0xff]
    %v221 = vld [vmem:[#allocation3] sm:$0xff]
    %v222 = vld [vmem:[#allocation4] sm:$0xff]
    %v223 = vld [vmem:[#allocation5] sm:$0xff]
    %v224 = vsub.f32 1.0, %v222
    %v225 = vmul.f32 %v224, 0.005
    %v226 = vadd.f32 %v222, %v225
    %v227 = vmul.f32 %v223, %v222
    %v228 = vmul.f32 %v227, %v221
    %v229 = vmul.f32 %v228, 0.02
    %v230 = vsub.f32 %v226, %v229
    %v231 = vmax.f32 %v230, 0.0
    %v232 = vmin.f32 %v231, 1.0
    %v233 = vsub.f32 %v125, %v223
    %v234 = vmul.f32 %v233, 0.00066666666
    %v235 = vadd.f32 %v223, %v234
    %v236 = vsub.f32 1.0, %v223
    %v237 = vmul.f32 %v125, %v236
    %v238 = vmul.f32 %v237, %v221
    %v239 = vmul.f32 %v238, 0.02
    %v240 = vadd.f32 %v235, %v239
    %v241 = vmax.f32 %v240, 0.0
    %v242 = vmin.f32 %v241, 1.0
    %s243 = scalar_lea.vmem [#allocation15], 8
    %244 = vst [vmem:[%s243] sm:$0xff] %v232
    %s245 = scalar_lea.vmem [#allocation17], 8
    %246 = vst [vmem:[%s245] sm:$0xff] %v242
    %247 = vst [vmem:[#allocation4] sm:$0xff] %v232
    %248 = vst [vmem:[#allocation5] sm:$0xff] %v242
    %249 = vmatprep.subr.mxu0 0.0
    %250 = vmatpush1.msra.mxu0 %v92
    %251 = vmatprep.subr.mxu0 0.0
    %252 = vmatpush1.msra.mxu0 %v93
    %253 = vmatprep.subr.mxu0 0.0
    %254 = vmatpush1.msra.mxu0 %v94
    %255 = vmatprep.subr.mxu0 0.0
    %256 = vmatpush1.msra.mxu0 %v95
    %257 = vmatprep.subr.mxu0 0.0
    %258 = vmatpush1.msra.mxu0 %v96
    %259 = vmatprep.subr.mxu0 0.0
    %260 = vmatpush1.msra.mxu0 %v97
    %261 = vmatprep.subr.mxu0 0.0
    %262 = vmatpush1.msra.mxu0 %v98
    %263 = vmatprep.subr.mxu0 0.0
    %264 = vmatpush1.msra.mxu0 %v99
    %265 = vmatprep.subr.mxu0 0.0
    %266 = vmatpush1.msra.mxu0 %v100
    %267 = vmatprep.subr.mxu0 0.0
    %268 = vmatpush1.msra.mxu0 %v101
    %269 = vmatprep.subr.mxu0 0.0
    %270 = vmatpush1.msra.mxu0 %v102
    %271 = vmatprep.subr.mxu0 0.0
    %272 = vmatpush1.msra.mxu0 %v103
    %273 = vmatprep.subr.mxu0 0.0
    %274 = vmatpush1.msra.mxu0 %v104
    %275 = vmatprep.subr.mxu0 0.0
    %276 = vmatpush1.msra.mxu0 %v105
    %277 = vmatprep.subr.mxu0 0.0
    %278 = vmatpush1.msra.mxu0 %v106
    %279 = vmatprep.subr.mxu0 0.0
    %280 = vmatpush1.msra.mxu0 %v107
    %281 = vmatprep.subr.mxu0 0.0
    %282 = vmatpush1.msra.mxu0 0.0
    %283 = vmatprep.subr.mxu0 0.0
    %284 = vmatpush1.msra.mxu0 0.0
    %285 = vmatprep.subr.mxu0 0.0
    %286 = vmatpush1.msra.mxu0 0.0
    %287 = vmatprep.subr.mxu0 0.0
    %288 = vmatpush1.msra.mxu0 0.0
    %289 = vmatprep.subr.mxu0 0.0
    %290 = vmatpush1.msra.mxu0 0.0
    %291 = vmatprep.subr.mxu0 0.0
    %292 = vmatpush1.msra.mxu0 0.0
    %293 = vmatprep.subr.mxu0 0.0
    %294 = vmatpush1.msra.mxu0 0.0
    %295 = vmatprep.subr.mxu0 0.0
    %296 = vmatpush1.msra.mxu0 0.0
    %297 = vmatprep.subr.mxu0 0.0
    %298 = vmatpush1.msra.mxu0 0.0
    %299 = vmatprep.subr.mxu0 0.0
    %300 = vmatpush1.msra.mxu0 0.0
    %301 = vmatprep.subr.mxu0 0.0
    %302 = vmatpush1.msra.mxu0 0.0
    %303 = vmatprep.subr.mxu0 0.0
    %304 = vmatpush1.msra.mxu0 0.0
    %305 = vmatprep.subr.mxu0 0.0
    %306 = vmatpush1.msra.mxu0 0.0
    %307 = vmatprep.subr.mxu0 0.0
    %308 = vmatpush1.msra.mxu0 0.0
    %309 = vmatprep.subr.mxu0 0.0
    %310 = vmatpush1.msra.mxu0 0.0
    %311 = vmatprep.subr.mxu0 0.0
    %312 = vmatpush1.msra.mxu0 0.0
    %313 = vmatprep.mubr.f32.mxu0 0.0
    %314 = vmatmul.mubr.f32.gmra.mrb[0].mxu0 %v228
    %v315 = vpop.f32.mrb[0].mxu0
    %v316 = vadd.f32 0.0, %v315
    %v317 = vpop.f32.mrb[0].mxu0
    %318 = vdwg.mxu0
    %s319 = scalar_lea.vmem [#allocation6], 8
    %v320 = vld [vmem:[%s319] sm:$0xff]
    %v321 = vadd.f32 %v320, %v316
    %v322 = vsub.f32 %v321, %v220
    %v323 = vmul.f32 %v322, 0.1
    %v324 = vadd.f32 %v220, %v323
    %s325 = scalar_lea.vmem [#allocation14], 8
    %326 = vst [vmem:[%s325] sm:$0xff] %v324
    %327 = vst [vmem:[#allocation2] sm:$0xff] %v324
    %v328 = vtanh.pop %v324
    %329 = vst [vmem:[#allocation3] sm:$0xff] %v328
    %v330 = vld [vmem:[#allocation2] sm:$0xff]
    %v331 = vld [vmem:[#allocation3] sm:$0xff]
    %v332 = vld [vmem:[#allocation4] sm:$0xff]
    %v333 = vld [vmem:[#allocation5] sm:$0xff]
    %v334 = vsub.f32 1.0, %v332
    %v335 = vmul.f32 %v334, 0.005
    %v336 = vadd.f32 %v332, %v335
    %v337 = vmul.f32 %v333, %v332
    %v338 = vmul.f32 %v337, %v331
    %v339 = vmul.f32 %v338, 0.02
    %v340 = vsub.f32 %v336, %v339
    %v341 = vmax.f32 %v340, 0.0
    %v342 = vmin.f32 %v341, 1.0
    %v343 = vsub.f32 %v125, %v333
    %v344 = vmul.f32 %v343, 0.00066666666
    %v345 = vadd.f32 %v333, %v344
    %v346 = vsub.f32 1.0, %v333
    %v347 = vmul.f32 %v125, %v346
    %v348 = vmul.f32 %v347, %v331
    %v349 = vmul.f32 %v348, 0.02
    %v350 = vadd.f32 %v345, %v349
    %v351 = vmax.f32 %v350, 0.0
    %v352 = vmin.f32 %v351, 1.0
    %s353 = scalar_lea.vmem [#allocation15], 16
    %354 = vst [vmem:[%s353] sm:$0xff] %v342
    %s355 = scalar_lea.vmem [#allocation17], 16
    %356 = vst [vmem:[%s355] sm:$0xff] %v352
    %357 = vst [vmem:[#allocation4] sm:$0xff] %v342
    %358 = vst [vmem:[#allocation5] sm:$0xff] %v352
    %359 = vmatprep.subr.mxu0 0.0
    %360 = vmatpush1.msra.mxu0 %v92
    %361 = vmatprep.subr.mxu0 0.0
    %362 = vmatpush1.msra.mxu0 %v93
    %363 = vmatprep.subr.mxu0 0.0
    %364 = vmatpush1.msra.mxu0 %v94
    %365 = vmatprep.subr.mxu0 0.0
    %366 = vmatpush1.msra.mxu0 %v95
    %367 = vmatprep.subr.mxu0 0.0
    %368 = vmatpush1.msra.mxu0 %v96
    %369 = vmatprep.subr.mxu0 0.0
    %370 = vmatpush1.msra.mxu0 %v97
    %371 = vmatprep.subr.mxu0 0.0
    %372 = vmatpush1.msra.mxu0 %v98
    %373 = vmatprep.subr.mxu0 0.0
    %374 = vmatpush1.msra.mxu0 %v99
    %375 = vmatprep.subr.mxu0 0.0
    %376 = vmatpush1.msra.mxu0 %v100
    %377 = vmatprep.subr.mxu0 0.0
    %378 = vmatpush1.msra.mxu0 %v101
    %379 = vmatprep.subr.mxu0 0.0
    %380 = vmatpush1.msra.mxu0 %v102
    %381 = vmatprep.subr.mxu0 0.0
    %382 = vmatpush1.msra.mxu0 %v103
    %383 = vmatprep.subr.mxu0 0.0
    %384 = vmatpush1.msra.mxu0 %v104
    %385 = vmatprep.subr.mxu0 0.0
    %386 = vmatpush1.msra.mxu0 %v105
    %387 = vmatprep.subr.mxu0 0.0
    %388 = vmatpush1.msra.mxu0 %v106
    %389 = vmatprep.subr.mxu0 0.0
    %390 = vmatpush1.msra.mxu0 %v107
    %391 = vmatprep.subr.mxu0 0.0
    %392 = vmatpush1.msra.mxu0 0.0
    %393 = vmatprep.subr.mxu0 0.0
    %394 = vmatpush1.msra.mxu0 0.0
    %395 = vmatprep.subr.mxu0 0.0
    %396 = vmatpush1.msra.mxu0 0.0
    %397 = vmatprep.subr.mxu0 0.0
    %398 = vmatpush1.msra.mxu0 0.0
    %399 = vmatprep.subr.mxu0 0.0
    %400 = vmatpush1.msra.mxu0 0.0
    %401 = vmatprep.subr.mxu0 0.0
    %402 = vmatpush1.msra.mxu0 0.0
    %403 = vmatprep.subr.mxu0 0.0
    %404 = vmatpush1.msra.mxu0 0.0
    %405 = vmatprep.subr.mxu0 0.0
    %406 = vmatpush1.msra.mxu0 0.0
    %407 = vmatprep.subr.mxu0 0.0
    %408 = vmatpush1.msra.mxu0 0.0
    %409 = vmatprep.subr.mxu0 0.0
    %410 = vmatpush1.msra.mxu0 0.0
    %411 = vmatprep.subr.mxu0 0.0
    %412 = vmatpush1.msra.mxu0 0.0
    %413 = vmatprep.subr.mxu0 0.0
    %414 = vmatpush1.msra.mxu0 0.0
    %415 = vmatprep.subr.mxu0 0.0
    %416 = vmatpush1.msra.mxu0 0.0
    %417 = vmatprep.subr.mxu0 0.0
    %418 = vmatpush1.msra.mxu0 0.0
    %419 = vmatprep.subr.mxu0 0.0
    %420 = vmatpush1.msra.mxu0 0.0
    %421 = vmatprep.subr.mxu0 0.0
    %422 = vmatpush1.msra.mxu0 0.0
    %423 = vmatprep.mubr.f32.mxu0 0.0
    %424 = vmatmul.mubr.f32.gmra.mrb[0].mxu0 %v338
    %v425 = vpop.f32.mrb[0].mxu0
    %v426 = vadd.f32 0.0, %v425
    %v427 = vpop.f32.mrb[0].mxu0
    %428 = vdwg.mxu0
    %s429 = scalar_lea.vmem [#allocation6], 16
    %v430 = vld [vmem:[%s429] sm:$0xff]
    %v431 = vadd.f32 %v430, %v426
    %v432 = vsub.f32 %v431, %v330
    %v433 = vmul.f32 %v432, 0.1
    %v434 = vadd.f32 %v330, %v433
    %s435 = scalar_lea.vmem [#allocation14], 16
    %436 = vst [vmem:[%s435] sm:$0xff] %v434
    %437 = vst [vmem:[#allocation2] sm:$0xff] %v434
    %v438 = vtanh.pop %v434
    %439 = vst [vmem:[#allocation3] sm:$0xff] %v438
    %v440 = vld [vmem:[#allocation2] sm:$0xff]
    %v441 = vld [vmem:[#allocation3] sm:$0xff]
    %v442 = vld [vmem:[#allocation4] sm:$0xff]
    %v443 = vld [vmem:[#allocation5] sm:$0xff]
    %v444 = vsub.f32 1.0, %v442
    %v445 = vmul.f32 %v444, 0.005
    %v446 = vadd.f32 %v442, %v445
    %v447 = vmul.f32 %v443, %v442
    %v448 = vmul.f32 %v447, %v441
    %v449 = vmul.f32 %v448, 0.02
    %v450 = vsub.f32 %v446, %v449
    %v451 = vmax.f32 %v450, 0.0
    %v452 = vmin.f32 %v451, 1.0
    %v453 = vsub.f32 %v125, %v443
    %v454 = vmul.f32 %v453, 0.00066666666
    %v455 = vadd.f32 %v443, %v454
    %v456 = vsub.f32 1.0, %v443
    %v457 = vmul.f32 %v125, %v456
    %v458 = vmul.f32 %v457, %v441
    %v459 = vmul.f32 %v458, 0.02
    %v460 = vadd.f32 %v455, %v459
    %v461 = vmax.f32 %v460, 0.0
    %v462 = vmin.f32 %v461, 1.0
    %s463 = scalar_lea.vmem [#allocation15], 24
    %464 = vst [vmem:[%s463] sm:$0xff] %v452
    %s465 = scalar_lea.vmem [#allocation17], 24
    %466 = vst [vmem:[%s465] sm:$0xff] %v462
    %467 = vst [vmem:[#allocation4] sm:$0xff] %v452
    %468 = vst [vmem:[#allocation5] sm:$0xff] %v462
    %469 = vmatprep.subr.mxu0 0.0
    %470 = vmatpush1.msra.mxu0 %v92
    %471 = vmatprep.subr.mxu0 0.0
    %472 = vmatpush1.msra.mxu0 %v93
    %473 = vmatprep.subr.mxu0 0.0
    %474 = vmatpush1.msra.mxu0 %v94
    %475 = vmatprep.subr.mxu0 0.0
    %476 = vmatpush1.msra.mxu0 %v95
    %477 = vmatprep.subr.mxu0 0.0
    %478 = vmatpush1.msra.mxu0 %v96
    %479 = vmatprep.subr.mxu0 0.0
    %480 = vmatpush1.msra.mxu0 %v97
    %481 = vmatprep.subr.mxu0 0.0
    %482 = vmatpush1.msra.mxu0 %v98
    %483 = vmatprep.subr.mxu0 0.0
    %484 = vmatpush1.msra.mxu0 %v99
    %485 = vmatprep.subr.mxu0 0.0
    %486 = vmatpush1.msra.mxu0 %v100
    %487 = vmatprep.subr.mxu0 0.0
    %488 = vmatpush1.msra.mxu0 %v101
    %489 = vmatprep.subr.mxu0 0.0
    %490 = vmatpush1.msra.mxu0 %v102
    %491 = vmatprep.subr.mxu0 0.0
    %492 = vmatpush1.msra.mxu0 %v103
    %493 = vmatprep.subr.mxu0 0.0
    %494 = vmatpush1.msra.mxu0 %v104
    %495 = vmatprep.subr.mxu0 0.0
    %496 = vmatpush1.msra.mxu0 %v105
    %497 = vmatprep.subr.mxu0 0.0
    %498 = vmatpush1.msra.mxu0 %v106
    %499 = vmatprep.subr.mxu0 0.0
    %500 = vmatpush1.msra.mxu0 %v107
    %501 = vmatprep.subr.mxu0 0.0
    %502 = vmatpush1.msra.mxu0 0.0
    %503 = vmatprep.subr.mxu0 0.0
    %504 = vmatpush1.msra.mxu0 0.0
    %505 = vmatprep.subr.mxu0 0.0
    %506 = vmatpush1.msra.mxu0 0.0
    %507 = vmatprep.subr.mxu0 0.0
    %508 = vmatpush1.msra.mxu0 0.0
    %509 = vmatprep.subr.mxu0 0.0
    %510 = vmatpush1.msra.mxu0 0.0
    %511 = vmatprep.subr.mxu0 0.0
    %512 = vmatpush1.msra.mxu0 0.0
    %513 = vmatprep.subr.mxu0 0.0
    %514 = vmatpush1.msra.mxu0 0.0
    %515 = vmatprep.subr.mxu0 0.0
    %516 = vmatpush1.msra.mxu0 0.0
    %517 = vmatprep.subr.mxu0 0.0
    %518 = vmatpush1.msra.mxu0 0.0
    %519 = vmatprep.subr.mxu0 0.0
    %520 = vmatpush1.msra.mxu0 0.0
    %521 = vmatprep.subr.mxu0 0.0
    %522 = vmatpush1.msra.mxu0 0.0
    %523 = vmatprep.subr.mxu0 0.0
    %524 = vmatpush1.msra.mxu0 0.0
    %525 = vmatprep.subr.mxu0 0.0
    %526 = vmatpush1.msra.mxu0 0.0
    %527 = vmatprep.subr.mxu0 0.0
    %528 = vmatpush1.msra.mxu0 0.0
    %529 = vmatprep.subr.mxu0 0.0
    %530 = vmatpush1.msra.mxu0 0.0
    %531 = vmatprep.subr.mxu0 0.0
    %532 = vmatpush1.msra.mxu0 0.0
    %533 = vmatprep.mubr.f32.mxu0 0.0
    %534 = vmatmul.mubr.f32.gmra.mrb[0].mxu0 %v448
    %v535 = vpop.f32.mrb[0].mxu0
    %v536 = vadd.f32 0.0, %v535
    %v537 = vpop.f32.mrb[0].mxu0
    %538 = vdwg.mxu0
    %s539 = scalar_lea.vmem [#allocation6], 24
    %v540 = vld [vmem:[%s539] sm:$0xff]
    %v541 = vadd.f32 %v540, %v536
    %v542 = vsub.f32 %v541, %v440
    %v543 = vmul.f32 %v542, 0.1
    %v544 = vadd.f32 %v440, %v543
    %s545 = scalar_lea.vmem [#allocation14], 24
    %546 = vst [vmem:[%s545] sm:$0xff] %v544
    %547 = vst [vmem:[#allocation2] sm:$0xff] %v544
    %v548 = vtanh.pop %v544
    %549 = vst [vmem:[#allocation3] sm:$0xff] %v548
    %v550 = vld [vmem:[#allocation2] sm:$0xff]
    %v551 = vld [vmem:[#allocation3] sm:$0xff]
    %v552 = vld [vmem:[#allocation4] sm:$0xff]
    %v553 = vld [vmem:[#allocation5] sm:$0xff]
    %v554 = vsub.f32 1.0, %v552
    %v555 = vmul.f32 %v554, 0.005
    %v556 = vadd.f32 %v552, %v555
    %v557 = vmul.f32 %v553, %v552
    %v558 = vmul.f32 %v557, %v551
    %v559 = vmul.f32 %v558, 0.02
    %v560 = vsub.f32 %v556, %v559
    %v561 = vmax.f32 %v560, 0.0
    %v562 = vmin.f32 %v561, 1.0
    %v563 = vsub.f32 %v125, %v553
    %v564 = vmul.f32 %v563, 0.00066666666
    %v565 = vadd.f32 %v553, %v564
    %v566 = vsub.f32 1.0, %v553
    %v567 = vmul.f32 %v125, %v566
    %v568 = vmul.f32 %v567, %v551
    %v569 = vmul.f32 %v568, 0.02
    %v570 = vadd.f32 %v565, %v569
    %v571 = vmax.f32 %v570, 0.0
    %v572 = vmin.f32 %v571, 1.0
    %s573 = scalar_lea.vmem [#allocation15], 32
    %574 = vst [vmem:[%s573] sm:$0xff] %v562
    %s575 = scalar_lea.vmem [#allocation17], 32
    %576 = vst [vmem:[%s575] sm:$0xff] %v572
    %577 = vst [vmem:[#allocation4] sm:$0xff] %v562
    %578 = vst [vmem:[#allocation5] sm:$0xff] %v572
    %579 = vmatprep.subr.mxu0 0.0
    %580 = vmatpush1.msra.mxu0 %v92
    %581 = vmatprep.subr.mxu0 0.0
    %582 = vmatpush1.msra.mxu0 %v93
    %583 = vmatprep.subr.mxu0 0.0
    %584 = vmatpush1.msra.mxu0 %v94
    %585 = vmatprep.subr.mxu0 0.0
    %586 = vmatpush1.msra.mxu0 %v95
    %587 = vmatprep.subr.mxu0 0.0
    %588 = vmatpush1.msra.mxu0 %v96
    %589 = vmatprep.subr.mxu0 0.0
    %590 = vmatpush1.msra.mxu0 %v97
    %591 = vmatprep.subr.mxu0 0.0
    %592 = vmatpush1.msra.mxu0 %v98
    %593 = vmatprep.subr.mxu0 0.0
    %594 = vmatpush1.msra.mxu0 %v99
    %595 = vmatprep.subr.mxu0 0.0
    %596 = vmatpush1.msra.mxu0 %v100
    %597 = vmatprep.subr.mxu0 0.0
    %598 = vmatpush1.msra.mxu0 %v101
    %599 = vmatprep.subr.mxu0 0.0
    %600 = vmatpush1.msra.mxu0 %v102
    %601 = vmatprep.subr.mxu0 0.0
    %602 = vmatpush1.msra.mxu0 %v103
    %603 = vmatprep.subr.mxu0 0.0
    %604 = vmatpush1.msra.mxu0 %v104
    %605 = vmatprep.subr.mxu0 0.0
    %606 = vmatpush1.msra.mxu0 %v105
    %607 = vmatprep.subr.mxu0 0.0
    %608 = vmatpush1.msra.mxu0 %v106
    %609 = vmatprep.subr.mxu0 0.0
    %610 = vmatpush1.msra.mxu0 %v107
    %611 = vmatprep.subr.mxu0 0.0
    %612 = vmatpush1.msra.mxu0 0.0
    %613 = vmatprep.subr.mxu0 0.0
    %614 = vmatpush1.msra.mxu0 0.0
    %615 = vmatprep.subr.mxu0 0.0
    %616 = vmatpush1.msra.mxu0 0.0
    %617 = vmatprep.subr.mxu0 0.0
    %618 = vmatpush1.msra.mxu0 0.0
    %619 = vmatprep.subr.mxu0 0.0
    %620 = vmatpush1.msra.mxu0 0.0
    %621 = vmatprep.subr.mxu0 0.0
    %622 = vmatpush1.msra.mxu0 0.0
    %623 = vmatprep.subr.mxu0 0.0
    %624 = vmatpush1.msra.mxu0 0.0
    %625 = vmatprep.subr.mxu0 0.0
    %626 = vmatpush1.msra.mxu0 0.0
    %627 = vmatprep.subr.mxu0 0.0
    %628 = vmatpush1.msra.mxu0 0.0
    %629 = vmatprep.subr.mxu0 0.0
    %630 = vmatpush1.msra.mxu0 0.0
    %631 = vmatprep.subr.mxu0 0.0
    %632 = vmatpush1.msra.mxu0 0.0
    %633 = vmatprep.subr.mxu0 0.0
    %634 = vmatpush1.msra.mxu0 0.0
    %635 = vmatprep.subr.mxu0 0.0
    %636 = vmatpush1.msra.mxu0 0.0
    %637 = vmatprep.subr.mxu0 0.0
    %638 = vmatpush1.msra.mxu0 0.0
    %639 = vmatprep.subr.mxu0 0.0
    %640 = vmatpush1.msra.mxu0 0.0
    %641 = vmatprep.subr.mxu0 0.0
    %642 = vmatpush1.msra.mxu0 0.0
    %643 = vmatprep.mubr.f32.mxu0 0.0
    %644 = vmatmul.mubr.f32.gmra.mrb[0].mxu0 %v558
    %v645 = vpop.f32.mrb[0].mxu0
    %v646 = vadd.f32 0.0, %v645
    %v647 = vpop.f32.mrb[0].mxu0
    %648 = vdwg.mxu0
    %s649 = scalar_lea.vmem [#allocation6], 32
    %v650 = vld [vmem:[%s649] sm:$0xff]
    %v651 = vadd.f32 %v650, %v646
    %v652 = vsub.f32 %v651, %v550
    %v653 = vmul.f32 %v652, 0.1
    %v654 = vadd.f32 %v550, %v653
    %s655 = scalar_lea.vmem [#allocation14], 32
    %656 = vst [vmem:[%s655] sm:$0xff] %v654
    %657 = vst [vmem:[#allocation2] sm:$0xff] %v654
    %v658 = vtanh.pop %v654
    %659 = vst [vmem:[#allocation3] sm:$0xff] %v658
    %v660 = vld [vmem:[#allocation2] sm:$0xff]
    %v661 = vld [vmem:[#allocation3] sm:$0xff]
    %v662 = vld [vmem:[#allocation4] sm:$0xff]
    %v663 = vld [vmem:[#allocation5] sm:$0xff]
    %v664 = vsub.f32 1.0, %v662
    %v665 = vmul.f32 %v664, 0.005
    %v666 = vadd.f32 %v662, %v665
    %v667 = vmul.f32 %v663, %v662
    %v668 = vmul.f32 %v667, %v661
    %v669 = vmul.f32 %v668, 0.02
    %v670 = vsub.f32 %v666, %v669
    %v671 = vmax.f32 %v670, 0.0
    %v672 = vmin.f32 %v671, 1.0
    %v673 = vsub.f32 %v125, %v663
    %v674 = vmul.f32 %v673, 0.00066666666
    %v675 = vadd.f32 %v663, %v674
    %v676 = vsub.f32 1.0, %v663
    %v677 = vmul.f32 %v125, %v676
    %v678 = vmul.f32 %v677, %v661
    %v679 = vmul.f32 %v678, 0.02
    %v680 = vadd.f32 %v675, %v679
    %v681 = vmax.f32 %v680, 0.0
    %v682 = vmin.f32 %v681, 1.0
    %s683 = scalar_lea.vmem [#allocation15], 40
    %684 = vst [vmem:[%s683] sm:$0xff] %v672
    %s685 = scalar_lea.vmem [#allocation17], 40
    %686 = vst [vmem:[%s685] sm:$0xff] %v682
    %687 = vst [vmem:[#allocation4] sm:$0xff] %v672
    %688 = vst [vmem:[#allocation5] sm:$0xff] %v682
    %689 = vmatprep.subr.mxu0 0.0
    %690 = vmatpush1.msra.mxu0 %v92
    %691 = vmatprep.subr.mxu0 0.0
    %692 = vmatpush1.msra.mxu0 %v93
    %693 = vmatprep.subr.mxu0 0.0
    %694 = vmatpush1.msra.mxu0 %v94
    %695 = vmatprep.subr.mxu0 0.0
    %696 = vmatpush1.msra.mxu0 %v95
    %697 = vmatprep.subr.mxu0 0.0
    %698 = vmatpush1.msra.mxu0 %v96
    %699 = vmatprep.subr.mxu0 0.0
    %700 = vmatpush1.msra.mxu0 %v97
    %701 = vmatprep.subr.mxu0 0.0
    %702 = vmatpush1.msra.mxu0 %v98
    %703 = vmatprep.subr.mxu0 0.0
    %704 = vmatpush1.msra.mxu0 %v99
    %705 = vmatprep.subr.mxu0 0.0
    %706 = vmatpush1.msra.mxu0 %v100
    %707 = vmatprep.subr.mxu0 0.0
    %708 = vmatpush1.msra.mxu0 %v101
    %709 = vmatprep.subr.mxu0 0.0
    %710 = vmatpush1.msra.mxu0 %v102
    %711 = vmatprep.subr.mxu0 0.0
    %712 = vmatpush1.msra.mxu0 %v103
    %713 = vmatprep.subr.mxu0 0.0
    %714 = vmatpush1.msra.mxu0 %v104
    %715 = vmatprep.subr.mxu0 0.0
    %716 = vmatpush1.msra.mxu0 %v105
    %717 = vmatprep.subr.mxu0 0.0
    %718 = vmatpush1.msra.mxu0 %v106
    %719 = vmatprep.subr.mxu0 0.0
    %720 = vmatpush1.msra.mxu0 %v107
    %721 = vmatprep.subr.mxu0 0.0
    %722 = vmatpush1.msra.mxu0 0.0
    %723 = vmatprep.subr.mxu0 0.0
    %724 = vmatpush1.msra.mxu0 0.0
    %725 = vmatprep.subr.mxu0 0.0
    %726 = vmatpush1.msra.mxu0 0.0
    %727 = vmatprep.subr.mxu0 0.0
    %728 = vmatpush1.msra.mxu0 0.0
    %729 = vmatprep.subr.mxu0 0.0
    %730 = vmatpush1.msra.mxu0 0.0
    %731 = vmatprep.subr.mxu0 0.0
    %732 = vmatpush1.msra.mxu0 0.0
    %733 = vmatprep.subr.mxu0 0.0
    %734 = vmatpush1.msra.mxu0 0.0
    %735 = vmatprep.subr.mxu0 0.0
    %736 = vmatpush1.msra.mxu0 0.0
    %737 = vmatprep.subr.mxu0 0.0
    %738 = vmatpush1.msra.mxu0 0.0
    %739 = vmatprep.subr.mxu0 0.0
    %740 = vmatpush1.msra.mxu0 0.0
    %741 = vmatprep.subr.mxu0 0.0
    %742 = vmatpush1.msra.mxu0 0.0
    %743 = vmatprep.subr.mxu0 0.0
    %744 = vmatpush1.msra.mxu0 0.0
    %745 = vmatprep.subr.mxu0 0.0
    %746 = vmatpush1.msra.mxu0 0.0
    %747 = vmatprep.subr.mxu0 0.0
    %748 = vmatpush1.msra.mxu0 0.0
    %749 = vmatprep.subr.mxu0 0.0
    %750 = vmatpush1.msra.mxu0 0.0
    %751 = vmatprep.subr.mxu0 0.0
    %752 = vmatpush1.msra.mxu0 0.0
    %753 = vmatprep.mubr.f32.mxu0 0.0
    %754 = vmatmul.mubr.f32.gmra.mrb[0].mxu0 %v668
    %v755 = vpop.f32.mrb[0].mxu0
    %v756 = vadd.f32 0.0, %v755
    %v757 = vpop.f32.mrb[0].mxu0
    %758 = vdwg.mxu0
    %s759 = scalar_lea.vmem [#allocation6], 40
    %v760 = vld [vmem:[%s759] sm:$0xff]
    %v761 = vadd.f32 %v760, %v756
    %v762 = vsub.f32 %v761, %v660
    %v763 = vmul.f32 %v762, 0.1
    %v764 = vadd.f32 %v660, %v763
    %s765 = scalar_lea.vmem [#allocation14], 40
    %766 = vst [vmem:[%s765] sm:$0xff] %v764
    %767 = vst [vmem:[#allocation2] sm:$0xff] %v764
    %v768 = vtanh.pop %v764
    %769 = vst [vmem:[#allocation3] sm:$0xff] %v768
    %v770 = vld [vmem:[#allocation2] sm:$0xff]
    %v771 = vld [vmem:[#allocation3] sm:$0xff]
    %v772 = vld [vmem:[#allocation4] sm:$0xff]
    %v773 = vld [vmem:[#allocation5] sm:$0xff]
    %v774 = vsub.f32 1.0, %v772
    %v775 = vmul.f32 %v774, 0.005
    %v776 = vadd.f32 %v772, %v775
    %v777 = vmul.f32 %v773, %v772
    %v778 = vmul.f32 %v777, %v771
    %v779 = vmul.f32 %v778, 0.02
    %v780 = vsub.f32 %v776, %v779
    %v781 = vmax.f32 %v780, 0.0
    %v782 = vmin.f32 %v781, 1.0
    %v783 = vsub.f32 %v125, %v773
    %v784 = vmul.f32 %v783, 0.00066666666
    %v785 = vadd.f32 %v773, %v784
    %v786 = vsub.f32 1.0, %v773
    %v787 = vmul.f32 %v125, %v786
    %v788 = vmul.f32 %v787, %v771
    %v789 = vmul.f32 %v788, 0.02
    %v790 = vadd.f32 %v785, %v789
    %v791 = vmax.f32 %v790, 0.0
    %v792 = vmin.f32 %v791, 1.0
    %s793 = scalar_lea.vmem [#allocation15], 48
    %794 = vst [vmem:[%s793] sm:$0xff] %v782
    %s795 = scalar_lea.vmem [#allocation17], 48
    %796 = vst [vmem:[%s795] sm:$0xff] %v792
    %797 = vst [vmem:[#allocation4] sm:$0xff] %v782
    %798 = vst [vmem:[#allocation5] sm:$0xff] %v792
    %799 = vmatprep.subr.mxu0 0.0
    %800 = vmatpush1.msra.mxu0 %v92
    %801 = vmatprep.subr.mxu0 0.0
    %802 = vmatpush1.msra.mxu0 %v93
    %803 = vmatprep.subr.mxu0 0.0
    %804 = vmatpush1.msra.mxu0 %v94
    %805 = vmatprep.subr.mxu0 0.0
    %806 = vmatpush1.msra.mxu0 %v95
    %807 = vmatprep.subr.mxu0 0.0
    %808 = vmatpush1.msra.mxu0 %v96
    %809 = vmatprep.subr.mxu0 0.0
    %810 = vmatpush1.msra.mxu0 %v97
    %811 = vmatprep.subr.mxu0 0.0
    %812 = vmatpush1.msra.mxu0 %v98
    %813 = vmatprep.subr.mxu0 0.0
    %814 = vmatpush1.msra.mxu0 %v99
    %815 = vmatprep.subr.mxu0 0.0
    %816 = vmatpush1.msra.mxu0 %v100
    %817 = vmatprep.subr.mxu0 0.0
    %818 = vmatpush1.msra.mxu0 %v101
    %819 = vmatprep.subr.mxu0 0.0
    %820 = vmatpush1.msra.mxu0 %v102
    %821 = vmatprep.subr.mxu0 0.0
    %822 = vmatpush1.msra.mxu0 %v103
    %823 = vmatprep.subr.mxu0 0.0
    %824 = vmatpush1.msra.mxu0 %v104
    %825 = vmatprep.subr.mxu0 0.0
    %826 = vmatpush1.msra.mxu0 %v105
    %827 = vmatprep.subr.mxu0 0.0
    %828 = vmatpush1.msra.mxu0 %v106
    %829 = vmatprep.subr.mxu0 0.0
    %830 = vmatpush1.msra.mxu0 %v107
    %831 = vmatprep.subr.mxu0 0.0
    %832 = vmatpush1.msra.mxu0 0.0
    %833 = vmatprep.subr.mxu0 0.0
    %834 = vmatpush1.msra.mxu0 0.0
    %835 = vmatprep.subr.mxu0 0.0
    %836 = vmatpush1.msra.mxu0 0.0
    %837 = vmatprep.subr.mxu0 0.0
    %838 = vmatpush1.msra.mxu0 0.0
    %839 = vmatprep.subr.mxu0 0.0
    %840 = vmatpush1.msra.mxu0 0.0
    %841 = vmatprep.subr.mxu0 0.0
    %842 = vmatpush1.msra.mxu0 0.0
    %843 = vmatprep.subr.mxu0 0.0
    %844 = vmatpush1.msra.mxu0 0.0
    %845 = vmatprep.subr.mxu0 0.0
    %846 = vmatpush1.msra.mxu0 0.0
    %847 = vmatprep.subr.mxu0 0.0
    %848 = vmatpush1.msra.mxu0 0.0
    %849 = vmatprep.subr.mxu0 0.0
    %850 = vmatpush1.msra.mxu0 0.0
    %851 = vmatprep.subr.mxu0 0.0
    %852 = vmatpush1.msra.mxu0 0.0
    %853 = vmatprep.subr.mxu0 0.0
    %854 = vmatpush1.msra.mxu0 0.0
    %855 = vmatprep.subr.mxu0 0.0
    %856 = vmatpush1.msra.mxu0 0.0
    %857 = vmatprep.subr.mxu0 0.0
    %858 = vmatpush1.msra.mxu0 0.0
    %859 = vmatprep.subr.mxu0 0.0
    %860 = vmatpush1.msra.mxu0 0.0
    %861 = vmatprep.subr.mxu0 0.0
    %862 = vmatpush1.msra.mxu0 0.0
    %863 = vmatprep.mubr.f32.mxu0 0.0
    %864 = vmatmul.mubr.f32.gmra.mrb[0].mxu0 %v778
    %v865 = vpop.f32.mrb[0].mxu0
    %v866 = vadd.f32 0.0, %v865
    %v867 = vpop.f32.mrb[0].mxu0
    %868 = vdwg.mxu0
    %s869 = scalar_lea.vmem [#allocation6], 48
    %v870 = vld [vmem:[%s869] sm:$0xff]
    %v871 = vadd.f32 %v870, %v866
    %v872 = vsub.f32 %v871, %v770
    %v873 = vmul.f32 %v872, 0.1
    %v874 = vadd.f32 %v770, %v873
    %s875 = scalar_lea.vmem [#allocation14], 48
    %876 = vst [vmem:[%s875] sm:$0xff] %v874
    %877 = vst [vmem:[#allocation2] sm:$0xff] %v874
    %v878 = vtanh.pop %v874
    %879 = vst [vmem:[#allocation3] sm:$0xff] %v878
    %v880 = vld [vmem:[#allocation2] sm:$0xff]
    %v881 = vld [vmem:[#allocation3] sm:$0xff]
    %v882 = vld [vmem:[#allocation4] sm:$0xff]
    %v883 = vld [vmem:[#allocation5] sm:$0xff]
    %v884 = vsub.f32 1.0, %v882
    %v885 = vmul.f32 %v884, 0.005
    %v886 = vadd.f32 %v882, %v885
    %v887 = vmul.f32 %v883, %v882
    %v888 = vmul.f32 %v887, %v881
    %v889 = vmul.f32 %v888, 0.02
    %v890 = vsub.f32 %v886, %v889
    %v891 = vmax.f32 %v890, 0.0
    %v892 = vmin.f32 %v891, 1.0
    %v893 = vsub.f32 %v125, %v883
    %v894 = vmul.f32 %v893, 0.00066666666
    %v895 = vadd.f32 %v883, %v894
    %v896 = vsub.f32 1.0, %v883
    %v897 = vmul.f32 %v125, %v896
    %v898 = vmul.f32 %v897, %v881
    %v899 = vmul.f32 %v898, 0.02
    %v900 = vadd.f32 %v895, %v899
    %v901 = vmax.f32 %v900, 0.0
    %v902 = vmin.f32 %v901, 1.0
    %s903 = scalar_lea.vmem [#allocation15], 56
    %904 = vst [vmem:[%s903] sm:$0xff] %v892
    %s905 = scalar_lea.vmem [#allocation17], 56
    %906 = vst [vmem:[%s905] sm:$0xff] %v902
    %907 = vst [vmem:[#allocation4] sm:$0xff] %v892
    %908 = vst [vmem:[#allocation5] sm:$0xff] %v902
    %909 = vmatprep.subr.mxu0 0.0
    %910 = vmatpush1.msra.mxu0 %v92
    %911 = vmatprep.subr.mxu0 0.0
    %912 = vmatpush1.msra.mxu0 %v93
    %913 = vmatprep.subr.mxu0 0.0
    %914 = vmatpush1.msra.mxu0 %v94
    %915 = vmatprep.subr.mxu0 0.0
    %916 = vmatpush1.msra.mxu0 %v95
    %917 = vmatprep.subr.mxu0 0.0
    %918 = vmatpush1.msra.mxu0 %v96
    %919 = vmatprep.subr.mxu0 0.0
    %920 = vmatpush1.msra.mxu0 %v97
    %921 = vmatprep.subr.mxu0 0.0
    %922 = vmatpush1.msra.mxu0 %v98
    %923 = vmatprep.subr.mxu0 0.0
    %924 = vmatpush1.msra.mxu0 %v99
    %925 = vmatprep.subr.mxu0 0.0
    %926 = vmatpush1.msra.mxu0 %v100
    %927 = vmatprep.subr.mxu0 0.0
    %928 = vmatpush1.msra.mxu0 %v101
    %929 = vmatprep.subr.mxu0 0.0
    %930 = vmatpush1.msra.mxu0 %v102
    %931 = vmatprep.subr.mxu0 0.0
    %932 = vmatpush1.msra.mxu0 %v103
    %933 = vmatprep.subr.mxu0 0.0
    %934 = vmatpush1.msra.mxu0 %v104
    %935 = vmatprep.subr.mxu0 0.0
    %936 = vmatpush1.msra.mxu0 %v105
    %937 = vmatprep.subr.mxu0 0.0
    %938 = vmatpush1.msra.mxu0 %v106
    %939 = vmatprep.subr.mxu0 0.0
    %940 = vmatpush1.msra.mxu0 %v107
    %941 = vmatprep.subr.mxu0 0.0
    %942 = vmatpush1.msra.mxu0 0.0
    %943 = vmatprep.subr.mxu0 0.0
    %944 = vmatpush1.msra.mxu0 0.0
    %945 = vmatprep.subr.mxu0 0.0
    %946 = vmatpush1.msra.mxu0 0.0
    %947 = vmatprep.subr.mxu0 0.0
    %948 = vmatpush1.msra.mxu0 0.0
    %949 = vmatprep.subr.mxu0 0.0
    %950 = vmatpush1.msra.mxu0 0.0
    %951 = vmatprep.subr.mxu0 0.0
    %952 = vmatpush1.msra.mxu0 0.0
    %953 = vmatprep.subr.mxu0 0.0
    %954 = vmatpush1.msra.mxu0 0.0
    %955 = vmatprep.subr.mxu0 0.0
    %956 = vmatpush1.msra.mxu0 0.0
    %957 = vmatprep.subr.mxu0 0.0
    %958 = vmatpush1.msra.mxu0 0.0
    %959 = vmatprep.subr.mxu0 0.0
    %960 = vmatpush1.msra.mxu0 0.0
    %961 = vmatprep.subr.mxu0 0.0
    %962 = vmatpush1.msra.mxu0 0.0
    %963 = vmatprep.subr.mxu0 0.0
    %964 = vmatpush1.msra.mxu0 0.0
    %965 = vmatprep.subr.mxu0 0.0
    %966 = vmatpush1.msra.mxu0 0.0
    %967 = vmatprep.subr.mxu0 0.0
    %968 = vmatpush1.msra.mxu0 0.0
    %969 = vmatprep.subr.mxu0 0.0
    %970 = vmatpush1.msra.mxu0 0.0
    %971 = vmatprep.subr.mxu0 0.0
    %972 = vmatpush1.msra.mxu0 0.0
    %973 = vmatprep.mubr.f32.mxu0 0.0
    %974 = vmatmul.mubr.f32.gmra.mrb[0].mxu0 %v888
    %v975 = vpop.f32.mrb[0].mxu0
    %v976 = vadd.f32 0.0, %v975
    %v977 = vpop.f32.mrb[0].mxu0
    %978 = vdwg.mxu0
    %s979 = scalar_lea.vmem [#allocation6], 56
    %v980 = vld [vmem:[%s979] sm:$0xff]
    %v981 = vadd.f32 %v980, %v976
    %v982 = vsub.f32 %v981, %v880
    %v983 = vmul.f32 %v982, 0.1
    %v984 = vadd.f32 %v880, %v983
    %s985 = scalar_lea.vmem [#allocation14], 56
    %986 = vst [vmem:[%s985] sm:$0xff] %v984
    %987 = vst [vmem:[#allocation2] sm:$0xff] %v984
    %v988 = vtanh.pop %v984
    %989 = vst [vmem:[#allocation3] sm:$0xff] %v988
    // Predicated region
    $region46: #{tpu_custom_call.1} parent=1 // pred_check
      _
    $region47: #{tpu_custom_call.1} parent=1 // pred_check_branch
      %991 = sbr.rel (0) target = $region49
    $region48: #{tpu_custom_call.1} parent=1 // pred_region
      %s993 = ssub.s32 1024, 1024
      %994 = vsyncadd [#allocation8], %s993
      %s995 = sshll.u32 [#allocation14], 4
      %s996 = int_to_ptr.vmem [resolvable:$true] %s995
      %1001 = dma.vmem_to_hbm [thread:$0]  %s996, 1024, %s6, [#allocation8], 128, 128, 8
    $region49: #{tpu_custom_call.1} parent=1 // pred_fallthru
      _
    // Predicated region
    $region50: #{tpu_custom_call.1} parent=1 // pred_check
      _
    $region51: #{tpu_custom_call.1} parent=1 // pred_check_branch
      %1003 = sbr.rel (0) target = $region53
    $region52: #{tpu_custom_call.1} parent=1 // pred_region
      %s1005 = ssub.s32 1024, 1024
      %1006 = vsyncadd [#allocation16], %s1005
      %s1007 = sshll.u32 [#allocation15], 4
      %s1008 = int_to_ptr.vmem [resolvable:$true] %s1007
      %1013 = dma.vmem_to_hbm [thread:$0]  %s1008, 1024, %s7, [#allocation16], 128, 128, 8
    $region53: #{tpu_custom_call.1} parent=1 // pred_fallthru
      _
    // Predicated region
    $region54: #{tpu_custom_call.1} parent=1 // pred_check
      _
    $region55: #{tpu_custom_call.1} parent=1 // pred_check_branch
      %1015 = sbr.rel (0) target = $region57
    $region56: #{tpu_custom_call.1} parent=1 // pred_region
      %s1017 = ssub.s32 1024, 1024
      %1018 = vsyncadd [#allocation16], %s1017
      %s1019 = sshll.u32 [#allocation17], 4
      %s1020 = int_to_ptr.vmem [resolvable:$true] %s1019
      %1025 = dma.vmem_to_hbm [thread:$0]  %s1020, 1024, %s8, [#allocation16], 128, 128, 8
    $region57: #{tpu_custom_call.1} parent=1 // pred_fallthru
      _
    // Predicated region
    $region58: #{tpu_custom_call.1} parent=1 // pred_check
      _
    $region59: #{tpu_custom_call.1} parent=1 // pred_check_branch
      %1027 = sbr.rel (0) target = $region61
    $region60: #{tpu_custom_call.1} parent=1 // pred_region
      %1028 = dma.done [#allocation8], 1024
    $region61: #{tpu_custom_call.1} parent=1 // pred_fallthru
      _
    // Predicated region
    $region62: #{tpu_custom_call.1} parent=1 // pred_check
      _
    $region63: #{tpu_custom_call.1} parent=1 // pred_check_branch
      %1030 = sbr.rel (0) target = $region65
    $region64: #{tpu_custom_call.1} parent=1 // pred_region
      %1031 = dma.done [#allocation16], 1024
    $region65: #{tpu_custom_call.1} parent=1 // pred_fallthru
      _
    // Predicated region
    $region66: #{tpu_custom_call.1} parent=1 // pred_check
      _
    $region67: #{tpu_custom_call.1} parent=1 // pred_check_branch
      %1033 = sbr.rel (0) target = $region69
    $region68: #{tpu_custom_call.1} parent=1 // pred_region
      %1034 = dma.done [#allocation16], 1024
    $region69: #{tpu_custom_call.1} parent=1 // pred_fallthru
      _
    %1035 = vsyncpa [#allocation7], 1
    %1036 = vsyncpa [#allocation10], 1
    %1037 = vsyncpa [#allocation13], 1
    %1038 = vsyncpa [#allocation8], 1
    %1039 = vsyncpa [#allocation16], 1

</llo_original>
